<compile_context>
chip_gen: v7x
topology: tpu7x:2x2x1
jax: 0.10.0
libtpu: 0.0.40
codegen_flags: <defaults>
</compile_context>

<pallas_src>
import functools

import jax
import jax.numpy as jnp
from jax.experimental import pallas as pl
from jax.experimental.pallas import tpu as pltpu

_ROW_TILE = 512      # row tile for FFN / fc (flattened B*L)
_HID_TILE = 512      # FFN hidden-dim tile
_COL_TILE = 512      # fc vocab tile
_SEQ_TILE = 256      # attention query tile
_DEFAULT_VMEM = 48 * 1024 * 1024

_vmem_cache = None


def _vmem_limit():
    """~75% of physical VMEM, capped at 96 MiB (v5e/v6e -> 96 MiB, v7x -> 48 MiB)."""
    global _vmem_cache
    if _vmem_cache is None:
        limit = _DEFAULT_VMEM
        try:
            cap = int(pltpu.get_tpu_info().vmem_capacity_bytes)
            limit = max(32 * 1024 * 1024, min(96 * 1024 * 1024, (cap * 3) // 4))
        except Exception:
            pass
        _vmem_cache = limit
    return _vmem_cache


def _round_up(n, m):
    return ((n + m - 1) // m) * m


def _seq_tile(n, target=_SEQ_TILE):
    """Largest multiple-of-8 divisor of n that is <= target (or n itself)."""
    if n <= target:
        return n
    t = target - (target % 8)
    while t >= 8:
        if n % t == 0:
            return t
        t -= 8
    return n


# ----------------------------------------------------------------------------
# Fused attention kernel: per-head (shared-weight) Q/K/V projections, softmax
# attention, per-head output-projection accumulation, residual + LayerNorm.
# Grid: (batch, query_tiles), both "parallel".
# ----------------------------------------------------------------------------
def _attn_add_ln_kernel(num_heads, eps,
                        x_ref, kv_ref,
                        wq_ref, bq_ref, wk_ref, bk_ref, wv_ref, bv_ref,
                        wo_ref, bo_ref, g_ref, b_ref, o_ref):
    tq, E = x_ref.shape[1], x_ref.shape[2]
    D = E // num_heads

    x = x_ref[0]                      # (tq, E) f32 -- also the residual
    kv = kv_ref[0]                    # (Lk, E) f32
    x_b = x.astype(jnp.bfloat16)
    kv_b = kv.astype(jnp.bfloat16)

    acc = jnp.zeros((tq, E), jnp.float32)
    for hh in range(num_heads):
        xh = x_b[:, hh * D:(hh + 1) * D]      # (tq, D)
        kvh = kv_b[:, hh * D:(hh + 1) * D]    # (Lk, D)

        # Shared per-head projections; the reference scale (2/num_heads, from
        # `num_heads ** 1 / 2`) is folded into wq/bq at init.
        q = jnp.dot(xh, wq_ref[...], preferred_element_type=jnp.float32) + bq_ref[...]
        k = jnp.dot(kvh, wk_ref[...], preferred_element_type=jnp.float32) + bk_ref[...]
        v = jnp.dot(kvh, wv_ref[...], preferred_element_type=jnp.float32) + bv_ref[...]

        att = jax.lax.dot_general(
            q.astype(jnp.bfloat16), k.astype(jnp.bfloat16),
            (((1,), (1,)), ((), ())),
            preferred_element_type=jnp.float32)                  # (tq, Lk)
        att = att - jnp.max(att, axis=-1, keepdims=True)
        p = jnp.exp(att)
        p = p * pl.reciprocal(jnp.sum(p, axis=-1, keepdims=True), approx=True)

        oh = jnp.dot(p.astype(jnp.bfloat16), v.astype(jnp.bfloat16),
                     preferred_element_type=jnp.float32)         # (tq, D)
        # wo_ref[hh] is W_out.T[hh::H, :] -> preserves the 'bqdh' flatten order.
        acc = acc + jnp.dot(oh.astype(jnp.bfloat16), wo_ref[hh],
                            preferred_element_type=jnp.float32)  # (tq, E)

    # Fused residual + LayerNorm epilogue (f32).
    y = acc + bo_ref[...] + x
    mu = jnp.mean(y, axis=-1, keepdims=True)
    yc = y - mu
    var = jnp.mean(yc * yc, axis=-1, keepdims=True)
    o_ref[0] = yc * jax.lax.rsqrt(var + eps) * g_ref[...] + b_ref[...]


def mha_add_ln(x, kv, ap, gamma, beta, num_heads, eps):
    B, Lq, E = x.shape
    Lk = kv.shape[1]
    D = E // num_heads
    tq = _seq_tile(Lq)
    full2 = lambda b, qi: (0, 0)
    full3 = lambda b, qi: (0, 0, 0)
    return pl.pallas_call(
        functools.partial(_attn_add_ln_kernel, num_heads, eps),
        out_shape=jax.ShapeDtypeStruct((B, Lq, E), jnp.float32),
        grid=(B, Lq // tq),
        in_specs=[
            pl.BlockSpec((1, tq, E), lambda b, qi: (b, qi, 0)),  # query / residual
            pl.BlockSpec((1, Lk, E), lambda b, qi: (b, 0, 0)),   # key / value src
            pl.BlockSpec((D, D), full2), pl.BlockSpec((1, D), full2),   # Wq, bq
            pl.BlockSpec((D, D), full2), pl.BlockSpec((1, D), full2),   # Wk, bk
            pl.BlockSpec((D, D), full2), pl.BlockSpec((1, D), full2),   # Wv, bv
            pl.BlockSpec((num_heads, D, E), full3),                     # Wo per-head
            pl.BlockSpec((1, E), full2),                                # bo
            pl.BlockSpec((1, E), full2), pl.BlockSpec((1, E), full2),   # ln g, b
        ],
        out_specs=pl.BlockSpec((1, tq, E), lambda b, qi: (b, qi, 0)),
        compiler_params=pltpu.CompilerParams(
            dimension_semantics=("parallel", "parallel"),
            vmem_limit_bytes=_vmem_limit()),
    )(x, kv,
      ap["wq_t"], ap["bq"], ap["wk_t"], ap["bk"], ap["wv_t"], ap["bv"],
      ap["wo_h"], ap["bo"], gamma, beta)


# ----------------------------------------------------------------------------
# FFN kernel: Linear -> GELU -> Linear(no bias) with hidden-dim tiling,
# f32 VMEM accumulator, residual + LN fused into the final-k epilogue.
# Grid: (row_tiles, hidden_tiles) -- hidden axis is the reduction ("arbitrary").
# ----------------------------------------------------------------------------
def _ffn_add_ln_kernel(eps, x_ref, w1_ref, b1_ref, w2_ref, g_ref, b_ref,
                       o_ref, acc_ref):
    k = pl.program_id(1)

    @pl.when(k == 0)
    def _():
        acc_ref[...] = jnp.zeros_like(acc_ref)

    x = x_ref[...]                                               # (tr, E) f32
    h = jnp.dot(x.astype(jnp.bfloat16), w1_ref[...],
                preferred_element_type=jnp.float32) + b1_ref[...]
    c = 0.7978845608028654  # sqrt(2/pi)  (tanh-GELU approximation)
    h = 0.5 * h * (1.0 + jnp.tanh(c * (h + 0.044715 * h * h * h)))
    acc_ref[...] += jnp.dot(h.astype(jnp.bfloat16), w2_ref[...],
                            preferred_element_type=jnp.float32)

    @pl.when(k == pl.num_programs(1) - 1)
    def _():
        y = acc_ref[...] + x
        mu = jnp.mean(y, axis=-1, keepdims=True)
        yc = y - mu
        var = jnp.mean(yc * yc, axis=-1, keepdims=True)
        o_ref[...] = yc * jax.lax.rsqrt(var + eps) * g_ref[...] + b_ref[...]


def ffn_add_ln(x, w1_t, b1, w2_t, gamma, beta, eps):
    B, L, E = x.shape
    rows = B * L
    Hd_pad = w1_t.shape[1]                       # padded to tile multiple at init
    th = min(_HID_TILE, Hd_pad)
    tr = min(_ROW_TILE, _round_up(rows, 8))
    rows_pad = _round_up(rows, tr)

    xf = x.reshape(rows, E)
    if rows_pad != rows:
        xf = jnp.pad(xf, ((0, rows_pad - rows), (0, 0)))

    out = pl.pallas_call(
        functools.partial(_ffn_add_ln_kernel, eps),
        out_shape=jax.ShapeDtypeStruct((rows_pad, E), jnp.float32),
        grid=(rows_pad // tr, Hd_pad // th),
        in_specs=[
            pl.BlockSpec((tr, E), lambda i, k: (i, 0)),
            pl.BlockSpec((E, th), lambda i, k: (0, k)),
            pl.BlockSpec((1, th), lambda i, k: (0, k)),
            pl.BlockSpec((th, E), lambda i, k: (k, 0)),
            pl.BlockSpec((1, E), lambda i, k: (0, 0)),
            pl.BlockSpec((1, E), lambda i, k: (0, 0)),
        ],
        out_specs=pl.BlockSpec((tr, E), lambda i, k: (i, 0)),
        scratch_shapes=[pltpu.VMEM((tr, E), jnp.float32)],
        compiler_params=pltpu.CompilerParams(
            dimension_semantics=("parallel", "arbitrary"),
            vmem_limit_bytes=_vmem_limit()),
    )(xf, w1_t, b1, w2_t, gamma, beta)

    if rows_pad != rows:
        out = out[:rows]
    return out.reshape(B, L, E)


# ----------------------------------------------------------------------------
# Final fc: (B*L, E) @ (E, V) + b.  Grid is (vocab_tiles, row_tiles) with rows
# innermost so each (E, tv) weight tile is DMA'd from HBM exactly once.
# ----------------------------------------------------------------------------
def _linear_kernel(x_ref, w_ref, b_ref, o_ref):
    o_ref[...] = jnp.dot(x_ref[...].astype(jnp.bfloat16), w_ref[...],
                         preferred_element_type=jnp.float32) + b_ref[...]


def linear(x, w_t, b):
    B, L, E = x.shape
    rows = B * L
    Vp = w_t.shape[1]                            # padded to tile multiple at init
    tv = min(_COL_TILE, Vp)
    tr = min(_ROW_TILE, _round_up(rows, 8))
    rows_pad = _round_up(rows, tr)

    xf = x.reshape(rows, E)
    if rows_pad != rows:
        xf = jnp.pad(xf, ((0, rows_pad - rows), (0, 0)))

    out = pl.pallas_call(
        _linear_kernel,
        out_shape=jax.ShapeDtypeStruct((rows_pad, Vp), jnp.float32),
        grid=(Vp // tv, rows_pad // tr),          # vocab outer, rows inner
        in_specs=[
            pl.BlockSpec((tr, E), lambda j, i: (i, 0)),
            pl.BlockSpec((E, tv), lambda j, i: (0, j)),   # invariant over inner i
            pl.BlockSpec((1, tv), lambda j, i: (0, j)),
        ],
        out_specs=pl.BlockSpec((tr, tv), lambda j, i: (i, j)),
        compiler_params=pltpu.CompilerParams(
            dimension_semantics=("parallel", "arbitrary"),
            vmem_limit_bytes=_vmem_limit()),
    )(xf, w_t, b)

    if rows_pad != rows:
        out = out[:rows]
    return out.reshape(B, L, Vp)


# ----------------------------------------------------------------------------
# Parameter init (PyTorch shape conventions) + one-time kernel-layout prep.
# All transposes / per-head splits / scale folding / zero-padding / bf16 casts
# happen HERE, never in the forward pass.
# ----------------------------------------------------------------------------
def _attn_params_prepared(key, E, H):
    D = E // H
    ks = jax.random.split(key, 8)
    s = 0.1
    # Reproduces the reference scaling `attention / (self.num_heads ** 1 / 2)`
    # which (Python precedence) is attention * (2 / num_heads); folded into Wq/bq.
    scale = 2.0 / H
    wq = jax.random.normal(ks[0], (D, D), jnp.float32) * s
    bq = jax.random.normal(ks[1], (D,), jnp.float32) * s
    wk = jax.random.normal(ks[2], (D, D), jnp.float32) * s
    bk = jax.random.normal(ks[3], (D,), jnp.float32) * s
    wv = jax.random.normal(ks[4], (D, D), jnp.float32) * s
    bv = jax.random.normal(ks[5], (D,), jnp.float32) * s
    wo = jax.random.normal(ks[6], (E, E), jnp.float32) * s      # (E_out, E_in)
    bo = jax.random.normal(ks[7], (E,), jnp.float32) * s

    wo_t = wo.T                                                  # (E_in, E_out)
    # Reference flattens 'bqdh' -> input feature index d*H + h; per head h the
    # relevant out-projection rows are wo_t[h::H, :]  (shape (D, E)).
    wo_heads = jnp.stack([wo_t[h::H, :] for h in range(H)], axis=0)   # (H, D, E)

    return {
        "wq_t": (wq.T * scale).astype(jnp.bfloat16),   # (D, D), scale folded
        "bq": (bq * scale).reshape(1, D),              # f32
        "wk_t": wk.T.astype(jnp.bfloat16),
        "bk": bk.reshape(1, D),
        "wv_t": wv.T.astype(jnp.bfloat16),
        "bv": bv.reshape(1, D),
        "wo_h": wo_heads.astype(jnp.bfloat16),         # (H, D, E)
        "bo": bo.reshape(1, E),
    }


def init_decoder_params(key, vocab, E, num_layers, fe, H, max_len):
    keys = jax.random.split(key, 3 + num_layers)

    # fc weight: pad vocab to a tile multiple (zero columns are sliced off).
    v_tile = min(_COL_TILE, _round_up(vocab, 128))
    V_pad = _round_up(vocab, v_tile)
    fc_w = jax.random.normal(keys[1], (vocab, E), jnp.float32) * 0.1
    fc_b = jax.random.normal(keys[2], (vocab,), jnp.float32) * 0.1
    fc_w_t = jnp.pad(fc_w.T, ((0, 0), (0, V_pad - vocab))).astype(jnp.bfloat16)
    fc_b_p = jnp.pad(fc_b, (0, V_pad - vocab)).reshape(1, V_pad)

    params = {
        "emb": jax.random.normal(keys[0], (vocab, E), jnp.float32) * 0.1,
        # matches nn.Parameter(torch.zeros(1, max_len, embed_out))
        "pos": jnp.zeros((1, max_len, E), jnp.float32),
        "fc_w_t": fc_w_t,      # (E, V_pad) bf16
        "fc_b": fc_b_p,        # (1, V_pad) f32
        "layers": [],
    }

    Hd = E * fe
    h_tile = min(_HID_TILE, _round_up(Hd, 128))
    Hd_pad = _round_up(Hd, h_tile)   # zero-padded hidden units contribute exactly 0

    for l in range(num_layers):
        lk = jax.random.split(keys[3 + l], 5)
        ff_w1 = jax.random.normal(lk[2], (Hd, E), jnp.float32) * 0.1   # (out, in)
        ff_b1 = jax.random.normal(lk[3], (Hd,), jnp.float32) * 0.1
        ff_w2 = jax.random.normal(lk[4], (E, Hd), jnp.float32) * 0.1   # (out, in)
        params["layers"].append({
            "self_attn": _attn_params_prepared(lk[0], E, H),
            "ln_g": jnp.ones((1, E), jnp.float32),
            "ln_b": jnp.zeros((1, E), jnp.float32),
            "cross_attn": _attn_params_prepared(lk[1], E, H),
            "ln1_g": jnp.ones((1, E), jnp.float32),
            "ln1_b": jnp.zeros((1, E), jnp.float32),
            "ln2_g": jnp.ones((1, E), jnp.float32),
            "ln2_b": jnp.zeros((1, E), jnp.float32),
            "ff_w1_t": jnp.pad(ff_w1.T, ((0, 0), (0, Hd_pad - Hd))
                               ).astype(jnp.bfloat16),        # (E, Hd_pad)
            "ff_b1": jnp.pad(ff_b1, (0, Hd_pad - Hd)).reshape(1, Hd_pad),
            "ff_w2_t": jnp.pad(ff_w2.T, ((0, Hd_pad - Hd), (0, 0))
                               ).astype(jnp.bfloat16),        # (Hd_pad, E)
        })
    return params


# ----------------------------------------------------------------------------
# Decoder forward (mirrors Decoder -> Decoder_Block -> Transformer_Block)
# ----------------------------------------------------------------------------
def decoder_forward(params, tokens, encoder_out, num_heads, vocab_size,
                    layer_norm_ep=1e-6):
    B, L = tokens.shape
    # glue: embedding gather + positional add (dropout is identity at inference)
    h = params["emb"][tokens] + params["pos"][:, :L, :]
    for lp in params["layers"]:
        # Decoder_Block: self-attention (mask=None) + residual + LN (fused)
        h = mha_add_ln(h, h, lp["self_attn"], lp["ln_g"], lp["ln_b"],
                       num_heads, layer_norm_ep)
        # Transformer_Block: cross-attention + residual + LN (fused)
        t = mha_add_ln(h, encoder_out, lp["cross_attn"], lp["ln1_g"],
                       lp["ln1_b"], num_heads, layer_norm_ep)
        # FFN + residual + LN (fused, hidden-dim tiled)
        h = ffn_add_ln(t, lp["ff_w1_t"], lp["ff_b1"], lp["ff_w2_t"],
                       lp["ln2_g"], lp["ln2_b"], layer_norm_ep)
    logits = linear(h, params["fc_w_t"], params["fc_b"])
    return logits[:, :, :vocab_size]


if __name__ == "__main__":
    vocab_size, embed_out, num_layers = 64, 32, 2
    forward_expansion, num_heads, max_len = 4, 4, 16
    B, L, L_enc = 2, 8, 8

    root = jax.random.PRNGKey(0)
    k_param, k_tok, k_enc = jax.random.split(root, 3)

    params = init_decoder_params(k_param, vocab_size, embed_out, num_layers,
                                 forward_expansion, num_heads, max_len)
    tokens = jax.random.randint(k_tok, (B, L), 0, vocab_size, dtype=jnp.int32)
    encoder_out = jax.random.normal(k_enc, (B, L_enc, embed_out), jnp.float32)

    fwd = jax.jit(functools.partial(decoder_forward, num_heads=num_heads,
                                    vocab_size=vocab_size))
    out = fwd(params, tokens, encoder_out)
    out = jax.block_until_ready(out)
    assert out.shape == (B, L, vocab_size)
    print("KERNEL_OK")
</pallas_src>

<mosaic_0001>
module attributes {stable_mosaic.version = 11 : i64} {
  func.func @_ffn_add_ln_kernel(%arg0: i32, %arg1: i32, %arg2: memref<16x32xf32, #tpu.memory_space<vmem>>, %arg3: memref<32x128xbf16, #tpu.memory_space<vmem>>, %arg4: memref<1x128xf32, #tpu.memory_space<vmem>>, %arg5: memref<128x32xbf16, #tpu.memory_space<vmem>>, %arg6: memref<1x32xf32, #tpu.memory_space<vmem>>, %arg7: memref<1x32xf32, #tpu.memory_space<vmem>>, %arg8: memref<16x32xf32, #tpu.memory_space<vmem>>, %arg9: memref<16x32xf32, #tpu.memory_space<vmem>>) attributes {dimension_semantics = [#tpu.dimension_semantics<parallel>, #tpu.dimension_semantics<arbitrary>], iteration_bounds = array<i64: 1, 1>, scalar_prefetch = 0 : i64, scratch_operands = 1 : i64, tpu.core_type = #tpu.core_type<tc>, window_params = [{transform_indices = @transform_0, window_bounds = array<i64: 16, 32>}, {transform_indices = @transform_1, window_bounds = array<i64: 32, 128>}, {transform_indices = @transform_2, window_bounds = array<i64: 1, 128>}, {transform_indices = @transform_3, window_bounds = array<i64: 128, 32>}, {pipeline_mode = #tpu.pipeline_mode<synchronous>, transform_indices = @transform_4, window_bounds = array<i64: 1, 32>}, {pipeline_mode = #tpu.pipeline_mode<synchronous>, transform_indices = @transform_5, window_bounds = array<i64: 1, 32>}, {transform_indices = @transform_6, window_bounds = array<i64: 16, 32>}]} {
    %c0_i32 = arith.constant 0 : i32
    %0 = arith.cmpi eq, %arg1, %c0_i32 : i32
    %1 = arith.extui %0 : i1 to i32
    %c0_i32_0 = arith.constant 0 : i32
    %2 = arith.cmpi ne, %1, %c0_i32_0 : i32
    scf.if %2 {
      %cst_19 = arith.constant 0.000000e+00 : f32
      %32 = vector.broadcast %cst_19 : f32 to vector<16x32xf32>
      %c0_20 = arith.constant 0 : index
      %c0_21 = arith.constant 0 : index
      %33 = vector.load %arg9[%c0_20, %c0_21] : memref<16x32xf32, #tpu.memory_space<vmem>>, vector<16x32xf32>
      tpu.vector_store %arg9[%c0_20, %c0_21], %32 {strides = array<i32>} : memref<16x32xf32, #tpu.memory_space<vmem>>, vector<16x32xf32>,
    } else {
    }
    %c0 = arith.constant 0 : index
    %c0_1 = arith.constant 0 : index
    %3 = vector.load %arg2[%c0, %c0_1] : memref<16x32xf32, #tpu.memory_space<vmem>>, vector<16x32xf32>
    %4 = arith.truncf %3 : vector<16x32xf32> to vector<16x32xbf16>
    %c0_2 = arith.constant 0 : index
    %c0_3 = arith.constant 0 : index
    %5 = vector.load %arg3[%c0_2, %c0_3] : memref<32x128xbf16, #tpu.memory_space<vmem>>, vector<32x128xbf16>
    %cst = arith.constant dense<0.000000e+00> : vector<16x128xf32>
    %6 = tpu.matmul %4, %5, %cst {dimension_numbers = #tpu.dot_dimension_numbers<[1], [0], [0], [1], [0, 0, 1, 1], [], []>} : vector<16x32xbf16>, vector<32x128xbf16>, vector<16x128xf32> -> vector<16x128xf32>
    %c0_4 = arith.constant 0 : index
    %c0_5 = arith.constant 0 : index
    %7 = vector.load %arg4[%c0_4, %c0_5] : memref<1x128xf32, #tpu.memory_space<vmem>>, vector<1x128xf32>
    %8 = vector.broadcast %7 : vector<1x128xf32> to vector<16x128xf32>
    %9 = arith.addf %6, %8 : vector<16x128xf32>
    %cst_6 = arith.constant 5.000000e-01 : f32
    %10 = vector.broadcast %cst_6 : f32 to vector<16x128xf32>
    %11 = arith.mulf %10, %9 : vector<16x128xf32>
    %cst_7 = arith.constant 4.471500e-02 : f32
    %12 = vector.broadcast %cst_7 : f32 to vector<16x128xf32>
    %13 = arith.mulf %12, %9 : vector<16x128xf32>
    %14 = arith.mulf %13, %9 : vector<16x128xf32>
    %15 = arith.mulf %14, %9 : vector<16x128xf32>
    %16 = arith.addf %9, %15 : vector<16x128xf32>
    %cst_8 = arith.constant 0.797884583 : f32
    %17 = vector.broadcast %cst_8 : f32 to vector<16x128xf32>
    %18 = arith.mulf %17, %16 : vector<16x128xf32>
    %19 = math.tanh %18 : vector<16x128xf32>
    %cst_9 = arith.constant 1.000000e+00 : f32
    %20 = vector.broadcast %cst_9 : f32 to vector<16x128xf32>
    %21 = arith.addf %20, %19 : vector<16x128xf32>
    %22 = arith.mulf %11, %21 : vector<16x128xf32>
    %c0_10 = arith.constant 0 : index
    %c0_11 = arith.constant 0 : index
    %23 = vector.load %arg9[%c0_10, %c0_11] : memref<16x32xf32, #tpu.memory_space<vmem>>, vector<16x32xf32>
    %24 = arith.truncf %22 : vector<16x128xf32> to vector<16x128xbf16>
    %c0_12 = arith.constant 0 : index
    %c0_13 = arith.constant 0 : index
    %25 = vector.load %arg5[%c0_12, %c0_13] : memref<128x32xbf16, #tpu.memory_space<vmem>>, vector<128x32xbf16>
    %cst_14 = arith.constant dense<0.000000e+00> : vector<16x32xf32>
    %26 = tpu.matmul %24, %25, %cst_14 {dimension_numbers = #tpu.dot_dimension_numbers<[1], [0], [0], [1], [0, 0, 1, 1], [], []>} : vector<16x128xbf16>, vector<128x32xbf16>, vector<16x32xf32> -> vector<16x32xf32>
    %27 = arith.addf %23, %26 : vector<16x32xf32>
    %c0_15 = arith.constant 0 : index
    %c0_16 = arith.constant 0 : index
    %28 = vector.load %arg9[%c0_15, %c0_16] : memref<16x32xf32, #tpu.memory_space<vmem>>, vector<16x32xf32>
    tpu.vector_store %arg9[%c0_15, %c0_16], %27 {strides = array<i32>} : memref<16x32xf32, #tpu.memory_space<vmem>>, vector<16x32xf32>,
    %c0_i32_17 = arith.constant 0 : i32
    %29 = arith.cmpi eq, %arg1, %c0_i32_17 : i32
    %30 = arith.extui %29 : i1 to i32
    %c0_i32_18 = arith.constant 0 : i32
    %31 = arith.cmpi ne, %30, %c0_i32_18 : i32
    scf.if %31 {
      %c0_19 = arith.constant 0 : index
      %c0_20 = arith.constant 0 : index
      %32 = vector.load %arg9[%c0_19, %c0_20] : memref<16x32xf32, #tpu.memory_space<vmem>>, vector<16x32xf32>
      %33 = arith.addf %32, %3 : vector<16x32xf32>
      %cst_21 = arith.constant dense<0.000000e+00> : vector<16xf32>
      %34 = vector.multi_reduction <add>, %33, %cst_21 [1] : vector<16x32xf32> to vector<16xf32>
      %35 = vector.shape_cast %34 : vector<16xf32> to vector<16x1xf32>
      %cst_22 = arith.constant 3.200000e+01 : f32
      %36 = vector.broadcast %cst_22 : f32 to vector<16x1xf32>
      %37 = arith.divf %35, %36 : vector<16x1xf32>
      %38 = vector.broadcast %37 : vector<16x1xf32> to vector<16x32xf32>
      %39 = arith.subf %33, %38 : vector<16x32xf32>
      %40 = arith.mulf %39, %39 : vector<16x32xf32>
      %cst_23 = arith.constant dense<0.000000e+00> : vector<16xf32>
      %41 = vector.multi_reduction <add>, %40, %cst_23 [1] : vector<16x32xf32> to vector<16xf32>
      %42 = vector.shape_cast %41 : vector<16xf32> to vector<16x1xf32>
      %cst_24 = arith.constant 3.200000e+01 : f32
      %43 = vector.broadcast %cst_24 : f32 to vector<16x1xf32>
      %44 = arith.divf %42, %43 : vector<16x1xf32>
      %cst_25 = arith.constant 9.99999997E-7 : f32
      %45 = vector.broadcast %cst_25 : f32 to vector<16x1xf32>
      %46 = arith.addf %44, %45 : vector<16x1xf32>
      %47 = math.rsqrt %46 : vector<16x1xf32>
      %48 = vector.broadcast %47 : vector<16x1xf32> to vector<16x32xf32>
      %49 = arith.mulf %39, %48 : vector<16x32xf32>
      %c0_26 = arith.constant 0 : index
      %c0_27 = arith.constant 0 : index
      %50 = vector.load %arg6[%c0_26, %c0_27] : memref<1x32xf32, #tpu.memory_space<vmem>>, vector<1x32xf32>
      %51 = vector.broadcast %50 : vector<1x32xf32> to vector<16x32xf32>
      %52 = arith.mulf %49, %51 : vector<16x32xf32>
      %c0_28 = arith.constant 0 : index
      %c0_29 = arith.constant 0 : index
      %53 = vector.load %arg7[%c0_28, %c0_29] : memref<1x32xf32, #tpu.memory_space<vmem>>, vector<1x32xf32>
      %54 = vector.broadcast %53 : vector<1x32xf32> to vector<16x32xf32>
      %55 = arith.addf %52, %54 : vector<16x32xf32>
      %c0_30 = arith.constant 0 : index
      %c0_31 = arith.constant 0 : index
      %56 = vector.load %arg8[%c0_30, %c0_31] : memref<16x32xf32, #tpu.memory_space<vmem>>, vector<16x32xf32>
      tpu.vector_store %arg8[%c0_30, %c0_31], %55 {strides = array<i32>} : memref<16x32xf32, #tpu.memory_space<vmem>>, vector<16x32xf32>,
    } else {
    }
    return
  }
  func.func @transform_0(%arg0: i32, %arg1: i32) -> (i32, i32) {
    %c0_i32 = arith.constant 0 : i32
    %c0_i32_0 = arith.constant 0 : i32
    return %arg0, %c0_i32 : i32, i32
  }
  func.func @transform_1(%arg0: i32, %arg1: i32) -> (i32, i32) {
    %c0_i32 = arith.constant 0 : i32
    %c0_i32_0 = arith.constant 0 : i32
    return %c0_i32, %arg1 : i32, i32
  }
  func.func @transform_2(%arg0: i32, %arg1: i32) -> (i32, i32) {
    %c0_i32 = arith.constant 0 : i32
    %c0_i32_0 = arith.constant 0 : i32
    return %c0_i32, %arg1 : i32, i32
  }
  func.func @transform_3(%arg0: i32, %arg1: i32) -> (i32, i32) {
    %c0_i32 = arith.constant 0 : i32
    %c0_i32_0 = arith.constant 0 : i32
    return %arg1, %c0_i32 : i32, i32
  }
  func.func @transform_4(%arg0: i32, %arg1: i32) -> (i32, i32) {
    %c0_i32 = arith.constant 0 : i32
    %c0_i32_0 = arith.constant 0 : i32
    %c0_i32_1 = arith.constant 0 : i32
    return %c0_i32, %c0_i32_0 : i32, i32
  }
  func.func @transform_5(%arg0: i32, %arg1: i32) -> (i32, i32) {
    %c0_i32 = arith.constant 0 : i32
    %c0_i32_0 = arith.constant 0 : i32
    %c0_i32_1 = arith.constant 0 : i32
    return %c0_i32, %c0_i32_0 : i32, i32
  }
  func.func @transform_6(%arg0: i32, %arg1: i32) -> (i32, i32) {
    %c0_i32 = arith.constant 0 : i32
    %c0_i32_0 = arith.constant 0 : i32
    return %arg0, %c0_i32 : i32, i32
  }
}

module attributes {stable_mosaic.version = 11 : i64} {
  func.func @_linear_kernel(%arg0: i32, %arg1: i32, %arg2: memref<16x32xf32, #tpu.memory_space<vmem>>, %arg3: memref<32x128xbf16, #tpu.memory_space<vmem>>, %arg4: memref<1x128xf32, #tpu.memory_space<vmem>>, %arg5: memref<16x128xf32, #tpu.memory_space<vmem>>) attributes {dimension_semantics = [#tpu.dimension_semantics<parallel>, #tpu.dimension_semantics<arbitrary>], iteration_bounds = array<i64: 1, 1>, scalar_prefetch = 0 : i64, scratch_operands = 0 : i64, tpu.core_type = #tpu.core_type<tc>, window_params = [{transform_indices = @transform_0, window_bounds = array<i64: 16, 32>}, {transform_indices = @transform_1, window_bounds = array<i64: 32, 128>}, {transform_indices = @transform_2, window_bounds = array<i64: 1, 128>}, {transform_indices = @transform_3, window_bounds = array<i64: 16, 128>}]} {
    %c0 = arith.constant 0 : index
    %c0_0 = arith.constant 0 : index
    %0 = vector.load %arg2[%c0, %c0_0] : memref<16x32xf32, #tpu.memory_space<vmem>>, vector<16x32xf32>
    %1 = arith.truncf %0 : vector<16x32xf32> to vector<16x32xbf16>
    %c0_1 = arith.constant 0 : index
    %c0_2 = arith.constant 0 : index
    %2 = vector.load %arg3[%c0_1, %c0_2] : memref<32x128xbf16, #tpu.memory_space<vmem>>, vector<32x128xbf16>
    %cst = arith.constant dense<0.000000e+00> : vector<16x128xf32>
    %3 = tpu.matmul %1, %2, %cst {dimension_numbers = #tpu.dot_dimension_numbers<[1], [0], [0], [1], [0, 0, 1, 1], [], []>} : vector<16x32xbf16>, vector<32x128xbf16>, vector<16x128xf32> -> vector<16x128xf32>
    %c0_3 = arith.constant 0 : index
    %c0_4 = arith.constant 0 : index
    %4 = vector.load %arg4[%c0_3, %c0_4] : memref<1x128xf32, #tpu.memory_space<vmem>>, vector<1x128xf32>
    %5 = vector.broadcast %4 : vector<1x128xf32> to vector<16x128xf32>
    %6 = arith.addf %3, %5 : vector<16x128xf32>
    %c0_5 = arith.constant 0 : index
    %c0_6 = arith.constant 0 : index
    %7 = vector.load %arg5[%c0_5, %c0_6] : memref<16x128xf32, #tpu.memory_space<vmem>>, vector<16x128xf32>
    tpu.vector_store %arg5[%c0_5, %c0_6], %6 {strides = array<i32>} : memref<16x128xf32, #tpu.memory_space<vmem>>, vector<16x128xf32>,
    return
  }
  func.func @transform_0(%arg0: i32, %arg1: i32) -> (i32, i32) {
    %c0_i32 = arith.constant 0 : i32
    %c0_i32_0 = arith.constant 0 : i32
    return %arg1, %c0_i32 : i32, i32
  }
  func.func @transform_1(%arg0: i32, %arg1: i32) -> (i32, i32) {
    %c0_i32 = arith.constant 0 : i32
    %c0_i32_0 = arith.constant 0 : i32
    return %c0_i32, %arg0 : i32, i32
  }
  func.func @transform_2(%arg0: i32, %arg1: i32) -> (i32, i32) {
    %c0_i32 = arith.constant 0 : i32
    %c0_i32_0 = arith.constant 0 : i32
    return %c0_i32, %arg0 : i32, i32
  }
  func.func @transform_3(%arg0: i32, %arg1: i32) -> (i32, i32) {
    %c0_i32 = arith.constant 0 : i32
    return %arg1, %arg0 : i32, i32
  }
}

module attributes {stable_mosaic.version = 11 : i64} {
  func.func @_attn_add_ln_kernel(%arg0: i32, %arg1: i32, %arg2: memref<1x8x32xf32, #tpu.memory_space<vmem>>, %arg3: memref<1x8x32xf32, #tpu.memory_space<vmem>>, %arg4: memref<8x8xbf16, #tpu.memory_space<vmem>>, %arg5: memref<1x8xf32, #tpu.memory_space<vmem>>, %arg6: memref<8x8xbf16, #tpu.memory_space<vmem>>, %arg7: memref<1x8xf32, #tpu.memory_space<vmem>>, %arg8: memref<8x8xbf16, #tpu.memory_space<vmem>>, %arg9: memref<1x8xf32, #tpu.memory_space<vmem>>, %arg10: memref<4x8x32xbf16, #tpu.memory_space<vmem>>, %arg11: memref<1x32xf32, #tpu.memory_space<vmem>>, %arg12: memref<1x32xf32, #tpu.memory_space<vmem>>, %arg13: memref<1x32xf32, #tpu.memory_space<vmem>>, %arg14: memref<1x8x32xf32, #tpu.memory_space<vmem>>) attributes {dimension_semantics = [#tpu.dimension_semantics<parallel>, #tpu.dimension_semantics<parallel>], iteration_bounds = array<i64: 2, 1>, scalar_prefetch = 0 : i64, scratch_operands = 0 : i64, tpu.core_type = #tpu.core_type<tc>, window_params = [{transform_indices = @transform_0, window_bounds = array<i64: 1, 8, 32>}, {transform_indices = @transform_1, window_bounds = array<i64: 1, 8, 32>}, {pipeline_mode = #tpu.pipeline_mode<synchronous>, transform_indices = @transform_2, window_bounds = array<i64: 8, 8>}, {pipeline_mode = #tpu.pipeline_mode<synchronous>, transform_indices = @transform_3, window_bounds = array<i64: 1, 8>}, {pipeline_mode = #tpu.pipeline_mode<synchronous>, transform_indices = @transform_4, window_bounds = array<i64: 8, 8>}, {pipeline_mode = #tpu.pipeline_mode<synchronous>, transform_indices = @transform_5, window_bounds = array<i64: 1, 8>}, {pipeline_mode = #tpu.pipeline_mode<synchronous>, transform_indices = @transform_6, window_bounds = array<i64: 8, 8>}, {pipeline_mode = #tpu.pipeline_mode<synchronous>, transform_indices = @transform_7, window_bounds = array<i64: 1, 8>}, {pipeline_mode = #tpu.pipeline_mode<synchronous>, transform_indices = @transform_8, window_bounds = array<i64: 4, 8, 32>}, {pipeline_mode = #tpu.pipeline_mode<synchronous>, transform_indices = @transform_9, window_bounds = array<i64: 1, 32>}, {pipeline_mode = #tpu.pipeline_mode<synchronous>, transform_indices = @transform_10, window_bounds = array<i64: 1, 32>}, {pipeline_mode = #tpu.pipeline_mode<synchronous>, transform_indices = @transform_11, window_bounds = array<i64: 1, 32>}, {transform_indices = @transform_12, window_bounds = array<i64: 1, 8, 32>}]} {
    %c0 = arith.constant 0 : index
    %c0_0 = arith.constant 0 : index
    %c0_1 = arith.constant 0 : index
    %0 = vector.load %arg2[%c0, %c0_0, %c0_1] : memref<1x8x32xf32, #tpu.memory_space<vmem>>, vector<1x8x32xf32>
    %1 = vector.shape_cast %0 : vector<1x8x32xf32> to vector<8x32xf32>
    %c0_2 = arith.constant 0 : index
    %c0_3 = arith.constant 0 : index
    %c0_4 = arith.constant 0 : index
    %2 = vector.load %arg3[%c0_2, %c0_3, %c0_4] : memref<1x8x32xf32, #tpu.memory_space<vmem>>, vector<1x8x32xf32>
    %3 = vector.shape_cast %2 : vector<1x8x32xf32> to vector<8x32xf32>
    %4 = arith.truncf %1 : vector<8x32xf32> to vector<8x32xbf16>
    %5 = arith.truncf %3 : vector<8x32xf32> to vector<8x32xbf16>
    %cst = arith.constant 0.000000e+00 : f32
    %6 = vector.broadcast %cst : f32 to vector<8x32xf32>
    %7 = vector.extract_strided_slice %4 {offsets = [0, 0], sizes = [8, 8], strides = [1, 1]} : vector<8x32xbf16> to vector<8x8xbf16>
    %8 = vector.extract_strided_slice %5 {offsets = [0, 0], sizes = [8, 8], strides = [1, 1]} : vector<8x32xbf16> to vector<8x8xbf16>
    %c0_5 = arith.constant 0 : index
    %c0_6 = arith.constant 0 : index
    %9 = vector.load %arg4[%c0_5, %c0_6] : memref<8x8xbf16, #tpu.memory_space<vmem>>, vector<8x8xbf16>
    %cst_7 = arith.constant dense<0.000000e+00> : vector<8x8xf32>
    %10 = tpu.matmul %7, %9, %cst_7 {dimension_numbers = #tpu.dot_dimension_numbers<[1], [0], [0], [1], [0, 0, 1, 1], [], []>} : vector<8x8xbf16>, vector<8x8xbf16>, vector<8x8xf32> -> vector<8x8xf32>
    %c0_8 = arith.constant 0 : index
    %c0_9 = arith.constant 0 : index
    %11 = vector.load %arg5[%c0_8, %c0_9] : memref<1x8xf32, #tpu.memory_space<vmem>>, vector<1x8xf32>
    %12 = vector.broadcast %11 : vector<1x8xf32> to vector<8x8xf32>
    %13 = arith.addf %10, %12 : vector<8x8xf32>
    %c0_10 = arith.constant 0 : index
    %c0_11 = arith.constant 0 : index
    %14 = vector.load %arg6[%c0_10, %c0_11] : memref<8x8xbf16, #tpu.memory_space<vmem>>, vector<8x8xbf16>
    %cst_12 = arith.constant dense<0.000000e+00> : vector<8x8xf32>
    %15 = tpu.matmul %8, %14, %cst_12 {dimension_numbers = #tpu.dot_dimension_numbers<[1], [0], [0], [1], [0, 0, 1, 1], [], []>} : vector<8x8xbf16>, vector<8x8xbf16>, vector<8x8xf32> -> vector<8x8xf32>
    %c0_13 = arith.constant 0 : index
    %c0_14 = arith.constant 0 : index
    %16 = vector.load %arg7[%c0_13, %c0_14] : memref<1x8xf32, #tpu.memory_space<vmem>>, vector<1x8xf32>
    %17 = vector.broadcast %16 : vector<1x8xf32> to vector<8x8xf32>
    %18 = arith.addf %15, %17 : vector<8x8xf32>
    %c0_15 = arith.constant 0 : index
    %c0_16 = arith.constant 0 : index
    %19 = vector.load %arg8[%c0_15, %c0_16] : memref<8x8xbf16, #tpu.memory_space<vmem>>, vector<8x8xbf16>
    %cst_17 = arith.constant dense<0.000000e+00> : vector<8x8xf32>
    %20 = tpu.matmul %8, %19, %cst_17 {dimension_numbers = #tpu.dot_dimension_numbers<[1], [0], [0], [1], [0, 0, 1, 1], [], []>} : vector<8x8xbf16>, vector<8x8xbf16>, vector<8x8xf32> -> vector<8x8xf32>
    %c0_18 = arith.constant 0 : index
    %c0_19 = arith.constant 0 : index
    %21 = vector.load %arg9[%c0_18, %c0_19] : memref<1x8xf32, #tpu.memory_space<vmem>>, vector<1x8xf32>
    %22 = vector.broadcast %21 : vector<1x8xf32> to vector<8x8xf32>
    %23 = arith.addf %20, %22 : vector<8x8xf32>
    %24 = arith.truncf %13 : vector<8x8xf32> to vector<8x8xbf16>
    %25 = arith.truncf %18 : vector<8x8xf32> to vector<8x8xbf16>
    %cst_20 = arith.constant dense<0.000000e+00> : vector<8x8xf32>
    %26 = tpu.matmul %24, %25, %cst_20 {dimension_numbers = #tpu.dot_dimension_numbers<[1], [1], [0], [0], [0, 0, 1, 0], [], []>} : vector<8x8xbf16>, vector<8x8xbf16>, vector<8x8xf32> -> vector<8x8xf32>
    %cst_21 = arith.constant dense<0xFF800000> : vector<8xf32>
    %27 = vector.multi_reduction <maximumf>, %26, %cst_21 [1] : vector<8x8xf32> to vector<8xf32>
    %28 = vector.shape_cast %27 : vector<8xf32> to vector<8x1xf32>
    %29 = vector.broadcast %28 : vector<8x1xf32> to vector<8x8xf32>
    %30 = arith.subf %26, %29 : vector<8x8xf32>
    %31 = math.exp %30 : vector<8x8xf32>
    %cst_22 = arith.constant dense<0.000000e+00> : vector<8xf32>
    %32 = vector.multi_reduction <add>, %31, %cst_22 [1] : vector<8x8xf32> to vector<8xf32>
    %33 = vector.shape_cast %32 : vector<8xf32> to vector<8x1xf32>
    %34 = tpu.reciprocal %33 {approx = true} : vector<8x1xf32> -> vector<8x1xf32>
    %35 = vector.broadcast %34 : vector<8x1xf32> to vector<8x8xf32>
    %36 = arith.mulf %31, %35 : vector<8x8xf32>
    %37 = arith.truncf %36 : vector<8x8xf32> to vector<8x8xbf16>
    %38 = arith.truncf %23 : vector<8x8xf32> to vector<8x8xbf16>
    %cst_23 = arith.constant dense<0.000000e+00> : vector<8x8xf32>
    %39 = tpu.matmul %37, %38, %cst_23 {dimension_numbers = #tpu.dot_dimension_numbers<[1], [0], [0], [1], [0, 0, 1, 1], [], []>} : vector<8x8xbf16>, vector<8x8xbf16>, vector<8x8xf32> -> vector<8x8xf32>
    %40 = arith.truncf %39 : vector<8x8xf32> to vector<8x8xbf16>
    %c0_24 = arith.constant 0 : index
    %c0_25 = arith.constant 0 : index
    %c0_26 = arith.constant 0 : index
    %41 = vector.load %arg10[%c0_24, %c0_25, %c0_26] : memref<4x8x32xbf16, #tpu.memory_space<vmem>>, vector<1x8x32xbf16>
    %42 = vector.shape_cast %41 : vector<1x8x32xbf16> to vector<8x32xbf16>
    %cst_27 = arith.constant dense<0.000000e+00> : vector<8x32xf32>
    %43 = tpu.matmul %40, %42, %cst_27 {dimension_numbers = #tpu.dot_dimension_numbers<[1], [0], [0], [1], [0, 0, 1, 1], [], []>} : vector<8x8xbf16>, vector<8x32xbf16>, vector<8x32xf32> -> vector<8x32xf32>
    %44 = arith.addf %6, %43 : vector<8x32xf32>
    %45 = vector.extract_strided_slice %4 {offsets = [0, 8], sizes = [8, 8], strides = [1, 1]} : vector<8x32xbf16> to vector<8x8xbf16>
    %46 = vector.extract_strided_slice %5 {offsets = [0, 8], sizes = [8, 8], strides = [1, 1]} : vector<8x32xbf16> to vector<8x8xbf16>
    %c0_28 = arith.constant 0 : index
    %c0_29 = arith.constant 0 : index
    %47 = vector.load %arg4[%c0_28, %c0_29] : memref<8x8xbf16, #tpu.memory_space<vmem>>, vector<8x8xbf16>
    %cst_30 = arith.constant dense<0.000000e+00> : vector<8x8xf32>
    %48 = tpu.matmul %45, %47, %cst_30 {dimension_numbers = #tpu.dot_dimension_numbers<[1], [0], [0], [1], [0, 0, 1, 1], [], []>} : vector<8x8xbf16>, vector<8x8xbf16>, vector<8x8xf32> -> vector<8x8xf32>
    %c0_31 = arith.constant 0 : index
    %c0_32 = arith.constant 0 : index
    %49 = vector.load %arg5[%c0_31, %c0_32] : memref<1x8xf32, #tpu.memory_space<vmem>>, vector<1x8xf32>
    %50 = vector.broadcast %49 : vector<1x8xf32> to vector<8x8xf32>
    %51 = arith.addf %48, %50 : vector<8x8xf32>
    %c0_33 = arith.constant 0 : index
    %c0_34 = arith.constant 0 : index
    %52 = vector.load %arg6[%c0_33, %c0_34] : memref<8x8xbf16, #tpu.memory_space<vmem>>, vector<8x8xbf16>
    %cst_35 = arith.constant dense<0.000000e+00> : vector<8x8xf32>
    %53 = tpu.matmul %46, %52, %cst_35 {dimension_numbers = #tpu.dot_dimension_numbers<[1], [0], [0], [1], [0, 0, 1, 1], [], []>} : vector<8x8xbf16>, vector<8x8xbf16>, vector<8x8xf32> -> vector<8x8xf32>
    %c0_36 = arith.constant 0 : index
    %c0_37 = arith.constant 0 : index
    %54 = vector.load %arg7[%c0_36, %c0_37] : memref<1x8xf32, #tpu.memory_space<vmem>>, vector<1x8xf32>
    %55 = vector.broadcast %54 : vector<1x8xf32> to vector<8x8xf32>
    %56 = arith.addf %53, %55 : vector<8x8xf32>
    %c0_38 = arith.constant 0 : index
    %c0_39 = arith.constant 0 : index
    %57 = vector.load %arg8[%c0_38, %c0_39] : memref<8x8xbf16, #tpu.memory_space<vmem>>, vector<8x8xbf16>
    %cst_40 = arith.constant dense<0.000000e+00> : vector<8x8xf32>
    %58 = tpu.matmul %46, %57, %cst_40 {dimension_numbers = #tpu.dot_dimension_numbers<[1], [0], [0], [1], [0, 0, 1, 1], [], []>} : vector<8x8xbf16>, vector<8x8xbf16>, vector<8x8xf32> -> vector<8x8xf32>
    %c0_41 = arith.constant 0 : index
    %c0_42 = arith.constant 0 : index
    %59 = vector.load %arg9[%c0_41, %c0_42] : memref<1x8xf32, #tpu.memory_space<vmem>>, vector<1x8xf32>
    %60 = vector.broadcast %59 : vector<1x8xf32> to vector<8x8xf32>
    %61 = arith.addf %58, %60 : vector<8x8xf32>
    %62 = arith.truncf %51 : vector<8x8xf32> to vector<8x8xbf16>
    %63 = arith.truncf %56 : vector<8x8xf32> to vector<8x8xbf16>
    %cst_43 = arith.constant dense<0.000000e+00> : vector<8x8xf32>
    %64 = tpu.matmul %62, %63, %cst_43 {dimension_numbers = #tpu.dot_dimension_numbers<[1], [1], [0], [0], [0, 0, 1, 0], [], []>} : vector<8x8xbf16>, vector<8x8xbf16>, vector<8x8xf32> -> vector<8x8xf32>
    %cst_44 = arith.constant dense<0xFF800000> : vector<8xf32>
    %65 = vector.multi_reduction <maximumf>, %64, %cst_44 [1] : vector<8x8xf32> to vector<8xf32>
    %66 = vector.shape_cast %65 : vector<8xf32> to vector<8x1xf32>
    %67 = vector.broadcast %66 : vector<8x1xf32> to vector<8x8xf32>
    %68 = arith.subf %64, %67 : vector<8x8xf32>
    %69 = math.exp %68 : vector<8x8xf32>
    %cst_45 = arith.constant dense<0.000000e+00> : vector<8xf32>
    %70 = vector.multi_reduction <add>, %69, %cst_45 [1] : vector<8x8xf32> to vector<8xf32>
    %71 = vector.shape_cast %70 : vector<8xf32> to vector<8x1xf32>
    %72 = tpu.reciprocal %71 {approx = true} : vector<8x1xf32> -> vector<8x1xf32>
    %73 = vector.broadcast %72 : vector<8x1xf32> to vector<8x8xf32>
    %74 = arith.mulf %69, %73 : vector<8x8xf32>
    %75 = arith.truncf %74 : vector<8x8xf32> to vector<8x8xbf16>
    %76 = arith.truncf %61 : vector<8x8xf32> to vector<8x8xbf16>
    %cst_46 = arith.constant dense<0.000000e+00> : vector<8x8xf32>
    %77 = tpu.matmul %75, %76, %cst_46 {dimension_numbers = #tpu.dot_dimension_numbers<[1], [0], [0], [1], [0, 0, 1, 1], [], []>} : vector<8x8xbf16>, vector<8x8xbf16>, vector<8x8xf32> -> vector<8x8xf32>
    %78 = arith.truncf %77 : vector<8x8xf32> to vector<8x8xbf16>
    %c1 = arith.constant 1 : index
    %c0_47 = arith.constant 0 : index
    %c0_48 = arith.constant 0 : index
    %79 = vector.load %arg10[%c1, %c0_47, %c0_48] : memref<4x8x32xbf16, #tpu.memory_space<vmem>>, vector<1x8x32xbf16>
    %80 = vector.shape_cast %79 : vector<1x8x32xbf16> to vector<8x32xbf16>
    %cst_49 = arith.constant dense<0.000000e+00> : vector<8x32xf32>
    %81 = tpu.matmul %78, %80, %cst_49 {dimension_numbers = #tpu.dot_dimension_numbers<[1], [0], [0], [1], [0, 0, 1, 1], [], []>} : vector<8x8xbf16>, vector<8x32xbf16>, vector<8x32xf32> -> vector<8x32xf32>
    %82 = arith.addf %44, %81 : vector<8x32xf32>
    %83 = vector.extract_strided_slice %4 {offsets = [0, 16], sizes = [8, 8], strides = [1, 1]} : vector<8x32xbf16> to vector<8x8xbf16>
    %84 = vector.extract_strided_slice %5 {offsets = [0, 16], sizes = [8, 8], strides = [1, 1]} : vector<8x32xbf16> to vector<8x8xbf16>
    %c0_50 = arith.constant 0 : index
    %c0_51 = arith.constant 0 : index
    %85 = vector.load %arg4[%c0_50, %c0_51] : memref<8x8xbf16, #tpu.memory_space<vmem>>, vector<8x8xbf16>
    %cst_52 = arith.constant dense<0.000000e+00> : vector<8x8xf32>
    %86 = tpu.matmul %83, %85, %cst_52 {dimension_numbers = #tpu.dot_dimension_numbers<[1], [0], [0], [1], [0, 0, 1, 1], [], []>} : vector<8x8xbf16>, vector<8x8xbf16>, vector<8x8xf32> -> vector<8x8xf32>
    %c0_53 = arith.constant 0 : index
    %c0_54 = arith.constant 0 : index
    %87 = vector.load %arg5[%c0_53, %c0_54] : memref<1x8xf32, #tpu.memory_space<vmem>>, vector<1x8xf32>
    %88 = vector.broadcast %87 : vector<1x8xf32> to vector<8x8xf32>
    %89 = arith.addf %86, %88 : vector<8x8xf32>
    %c0_55 = arith.constant 0 : index
    %c0_56 = arith.constant 0 : index
    %90 = vector.load %arg6[%c0_55, %c0_56] : memref<8x8xbf16, #tpu.memory_space<vmem>>, vector<8x8xbf16>
    %cst_57 = arith.constant dense<0.000000e+00> : vector<8x8xf32>
    %91 = tpu.matmul %84, %90, %cst_57 {dimension_numbers = #tpu.dot_dimension_numbers<[1], [0], [0], [1], [0, 0, 1, 1], [], []>} : vector<8x8xbf16>, vector<8x8xbf16>, vector<8x8xf32> -> vector<8x8xf32>
    %c0_58 = arith.constant 0 : index
    %c0_59 = arith.constant 0 : index
    %92 = vector.load %arg7[%c0_58, %c0_59] : memref<1x8xf32, #tpu.memory_space<vmem>>, vector<1x8xf32>
    %93 = vector.broadcast %92 : vector<1x8xf32> to vector<8x8xf32>
    %94 = arith.addf %91, %93 : vector<8x8xf32>
    %c0_60 = arith.constant 0 : index
    %c0_61 = arith.constant 0 : index
    %95 = vector.load %arg8[%c0_60, %c0_61] : memref<8x8xbf16, #tpu.memory_space<vmem>>, vector<8x8xbf16>
    %cst_62 = arith.constant dense<0.000000e+00> : vector<8x8xf32>
    %96 = tpu.matmul %84, %95, %cst_62 {dimension_numbers = #tpu.dot_dimension_numbers<[1], [0], [0], [1], [0, 0, 1, 1], [], []>} : vector<8x8xbf16>, vector<8x8xbf16>, vector<8x8xf32> -> vector<8x8xf32>
    %c0_63 = arith.constant 0 : index
    %c0_64 = arith.constant 0 : index
    %97 = vector.load %arg9[%c0_63, %c0_64] : memref<1x8xf32, #tpu.memory_space<vmem>>, vector<1x8xf32>
    %98 = vector.broadcast %97 : vector<1x8xf32> to vector<8x8xf32>
    %99 = arith.addf %96, %98 : vector<8x8xf32>
    %100 = arith.truncf %89 : vector<8x8xf32> to vector<8x8xbf16>
    %101 = arith.truncf %94 : vector<8x8xf32> to vector<8x8xbf16>
    %cst_65 = arith.constant dense<0.000000e+00> : vector<8x8xf32>
    %102 = tpu.matmul %100, %101, %cst_65 {dimension_numbers = #tpu.dot_dimension_numbers<[1], [1], [0], [0], [0, 0, 1, 0], [], []>} : vector<8x8xbf16>, vector<8x8xbf16>, vector<8x8xf32> -> vector<8x8xf32>
    %cst_66 = arith.constant dense<0xFF800000> : vector<8xf32>
    %103 = vector.multi_reduction <maximumf>, %102, %cst_66 [1] : vector<8x8xf32> to vector<8xf32>
    %104 = vector.shape_cast %103 : vector<8xf32> to vector<8x1xf32>
    %105 = vector.broadcast %104 : vector<8x1xf32> to vector<8x8xf32>
    %106 = arith.subf %102, %105 : vector<8x8xf32>
    %107 = math.exp %106 : vector<8x8xf32>
    %cst_67 = arith.constant dense<0.000000e+00> : vector<8xf32>
    %108 = vector.multi_reduction <add>, %107, %cst_67 [1] : vector<8x8xf32> to vector<8xf32>
    %109 = vector.shape_cast %108 : vector<8xf32> to vector<8x1xf32>
    %110 = tpu.reciprocal %109 {approx = true} : vector<8x1xf32> -> vector<8x1xf32>
    %111 = vector.broadcast %110 : vector<8x1xf32> to vector<8x8xf32>
    %112 = arith.mulf %107, %111 : vector<8x8xf32>
    %113 = arith.truncf %112 : vector<8x8xf32> to vector<8x8xbf16>
    %114 = arith.truncf %99 : vector<8x8xf32> to vector<8x8xbf16>
    %cst_68 = arith.constant dense<0.000000e+00> : vector<8x8xf32>
    %115 = tpu.matmul %113, %114, %cst_68 {dimension_numbers = #tpu.dot_dimension_numbers<[1], [0], [0], [1], [0, 0, 1, 1], [], []>} : vector<8x8xbf16>, vector<8x8xbf16>, vector<8x8xf32> -> vector<8x8xf32>
    %116 = arith.truncf %115 : vector<8x8xf32> to vector<8x8xbf16>
    %c2 = arith.constant 2 : index
    %c0_69 = arith.constant 0 : index
    %c0_70 = arith.constant 0 : index
    %117 = vector.load %arg10[%c2, %c0_69, %c0_70] : memref<4x8x32xbf16, #tpu.memory_space<vmem>>, vector<1x8x32xbf16>
    %118 = vector.shape_cast %117 : vector<1x8x32xbf16> to vector<8x32xbf16>
    %cst_71 = arith.constant dense<0.000000e+00> : vector<8x32xf32>
    %119 = tpu.matmul %116, %118, %cst_71 {dimension_numbers = #tpu.dot_dimension_numbers<[1], [0], [0], [1], [0, 0, 1, 1], [], []>} : vector<8x8xbf16>, vector<8x32xbf16>, vector<8x32xf32> -> vector<8x32xf32>
    %120 = arith.addf %82, %119 : vector<8x32xf32>
    %121 = vector.extract_strided_slice %4 {offsets = [0, 24], sizes = [8, 8], strides = [1, 1]} : vector<8x32xbf16> to vector<8x8xbf16>
    %122 = vector.extract_strided_slice %5 {offsets = [0, 24], sizes = [8, 8], strides = [1, 1]} : vector<8x32xbf16> to vector<8x8xbf16>
    %c0_72 = arith.constant 0 : index
    %c0_73 = arith.constant 0 : index
    %123 = vector.load %arg4[%c0_72, %c0_73] : memref<8x8xbf16, #tpu.memory_space<vmem>>, vector<8x8xbf16>
    %cst_74 = arith.constant dense<0.000000e+00> : vector<8x8xf32>
    %124 = tpu.matmul %121, %123, %cst_74 {dimension_numbers = #tpu.dot_dimension_numbers<[1], [0], [0], [1], [0, 0, 1, 1], [], []>} : vector<8x8xbf16>, vector<8x8xbf16>, vector<8x8xf32> -> vector<8x8xf32>
    %c0_75 = arith.constant 0 : index
    %c0_76 = arith.constant 0 : index
    %125 = vector.load %arg5[%c0_75, %c0_76] : memref<1x8xf32, #tpu.memory_space<vmem>>, vector<1x8xf32>
    %126 = vector.broadcast %125 : vector<1x8xf32> to vector<8x8xf32>
    %127 = arith.addf %124, %126 : vector<8x8xf32>
    %c0_77 = arith.constant 0 : index
    %c0_78 = arith.constant 0 : index
    %128 = vector.load %arg6[%c0_77, %c0_78] : memref<8x8xbf16, #tpu.memory_space<vmem>>, vector<8x8xbf16>
    %cst_79 = arith.constant dense<0.000000e+00> : vector<8x8xf32>
    %129 = tpu.matmul %122, %128, %cst_79 {dimension_numbers = #tpu.dot_dimension_numbers<[1], [0], [0], [1], [0, 0, 1, 1], [], []>} : vector<8x8xbf16>, vector<8x8xbf16>, vector<8x8xf32> -> vector<8x8xf32>
    %c0_80 = arith.constant 0 : index
    %c0_81 = arith.constant 0 : index
    %130 = vector.load %arg7[%c0_80, %c0_81] : memref<1x8xf32, #tpu.memory_space<vmem>>, vector<1x8xf32>
    %131 = vector.broadcast %130 : vector<1x8xf32> to vector<8x8xf32>
    %132 = arith.addf %129, %131 : vector<8x8xf32>
    %c0_82 = arith.constant 0 : index
    %c0_83 = arith.constant 0 : index
    %133 = vector.load %arg8[%c0_82, %c0_83] : memref<8x8xbf16, #tpu.memory_space<vmem>>, vector<8x8xbf16>
    %cst_84 = arith.constant dense<0.000000e+00> : vector<8x8xf32>
    %134 = tpu.matmul %122, %133, %cst_84 {dimension_numbers = #tpu.dot_dimension_numbers<[1], [0], [0], [1], [0, 0, 1, 1], [], []>} : vector<8x8xbf16>, vector<8x8xbf16>, vector<8x8xf32> -> vector<8x8xf32>
    %c0_85 = arith.constant 0 : index
    %c0_86 = arith.constant 0 : index
    %135 = vector.load %arg9[%c0_85, %c0_86] : memref<1x8xf32, #tpu.memory_space<vmem>>, vector<1x8xf32>
    %136 = vector.broadcast %135 : vector<1x8xf32> to vector<8x8xf32>
    %137 = arith.addf %134, %136 : vector<8x8xf32>
    %138 = arith.truncf %127 : vector<8x8xf32> to vector<8x8xbf16>
    %139 = arith.truncf %132 : vector<8x8xf32> to vector<8x8xbf16>
    %cst_87 = arith.constant dense<0.000000e+00> : vector<8x8xf32>
    %140 = tpu.matmul %138, %139, %cst_87 {dimension_numbers = #tpu.dot_dimension_numbers<[1], [1], [0], [0], [0, 0, 1, 0], [], []>} : vector<8x8xbf16>, vector<8x8xbf16>, vector<8x8xf32> -> vector<8x8xf32>
    %cst_88 = arith.constant dense<0xFF800000> : vector<8xf32>
    %141 = vector.multi_reduction <maximumf>, %140, %cst_88 [1] : vector<8x8xf32> to vector<8xf32>
    %142 = vector.shape_cast %141 : vector<8xf32> to vector<8x1xf32>
    %143 = vector.broadcast %142 : vector<8x1xf32> to vector<8x8xf32>
    %144 = arith.subf %140, %143 : vector<8x8xf32>
    %145 = math.exp %144 : vector<8x8xf32>
    %cst_89 = arith.constant dense<0.000000e+00> : vector<8xf32>
    %146 = vector.multi_reduction <add>, %145, %cst_89 [1] : vector<8x8xf32> to vector<8xf32>
    %147 = vector.shape_cast %146 : vector<8xf32> to vector<8x1xf32>
    %148 = tpu.reciprocal %147 {approx = true} : vector<8x1xf32> -> vector<8x1xf32>
    %149 = vector.broadcast %148 : vector<8x1xf32> to vector<8x8xf32>
    %150 = arith.mulf %145, %149 : vector<8x8xf32>
    %151 = arith.truncf %150 : vector<8x8xf32> to vector<8x8xbf16>
    %152 = arith.truncf %137 : vector<8x8xf32> to vector<8x8xbf16>
    %cst_90 = arith.constant dense<0.000000e+00> : vector<8x8xf32>
    %153 = tpu.matmul %151, %152, %cst_90 {dimension_numbers = #tpu.dot_dimension_numbers<[1], [0], [0], [1], [0, 0, 1, 1], [], []>} : vector<8x8xbf16>, vector<8x8xbf16>, vector<8x8xf32> -> vector<8x8xf32>
    %154 = arith.truncf %153 : vector<8x8xf32> to vector<8x8xbf16>
    %c3 = arith.constant 3 : index
    %c0_91 = arith.constant 0 : index
    %c0_92 = arith.constant 0 : index
    %155 = vector.load %arg10[%c3, %c0_91, %c0_92] : memref<4x8x32xbf16, #tpu.memory_space<vmem>>, vector<1x8x32xbf16>
    %156 = vector.shape_cast %155 : vector<1x8x32xbf16> to vector<8x32xbf16>
    %cst_93 = arith.constant dense<0.000000e+00> : vector<8x32xf32>
    %157 = tpu.matmul %154, %156, %cst_93 {dimension_numbers = #tpu.dot_dimension_numbers<[1], [0], [0], [1], [0, 0, 1, 1], [], []>} : vector<8x8xbf16>, vector<8x32xbf16>, vector<8x32xf32> -> vector<8x32xf32>
    %158 = arith.addf %120, %157 : vector<8x32xf32>
    %c0_94 = arith.constant 0 : index
    %c0_95 = arith.constant 0 : index
    %159 = vector.load %arg11[%c0_94, %c0_95] : memref<1x32xf32, #tpu.memory_space<vmem>>, vector<1x32xf32>
    %160 = vector.broadcast %159 : vector<1x32xf32> to vector<8x32xf32>
    %161 = arith.addf %158, %160 : vector<8x32xf32>
    %162 = arith.addf %161, %1 : vector<8x32xf32>
    %cst_96 = arith.constant dense<0.000000e+00> : vector<8xf32>
    %163 = vector.multi_reduction <add>, %162, %cst_96 [1] : vector<8x32xf32> to vector<8xf32>
    %164 = vector.shape_cast %163 : vector<8xf32> to vector<8x1xf32>
    %cst_97 = arith.constant 3.200000e+01 : f32
    %165 = vector.broadcast %cst_97 : f32 to vector<8x1xf32>
    %166 = arith.divf %164, %165 : vector<8x1xf32>
    %167 = vector.broadcast %166 : vector<8x1xf32> to vector<8x32xf32>
    %168 = arith.subf %162, %167 : vector<8x32xf32>
    %169 = arith.mulf %168, %168 : vector<8x32xf32>
    %cst_98 = arith.constant dense<0.000000e+00> : vector<8xf32>
    %170 = vector.multi_reduction <add>, %169, %cst_98 [1] : vector<8x32xf32> to vector<8xf32>
    %171 = vector.shape_cast %170 : vector<8xf32> to vector<8x1xf32>
    %cst_99 = arith.constant 3.200000e+01 : f32
    %172 = vector.broadcast %cst_99 : f32 to vector<8x1xf32>
    %173 = arith.divf %171, %172 : vector<8x1xf32>
    %cst_100 = arith.constant 9.99999997E-7 : f32
    %174 = vector.broadcast %cst_100 : f32 to vector<8x1xf32>
    %175 = arith.addf %173, %174 : vector<8x1xf32>
    %176 = math.rsqrt %175 : vector<8x1xf32>
    %177 = vector.broadcast %176 : vector<8x1xf32> to vector<8x32xf32>
    %178 = arith.mulf %168, %177 : vector<8x32xf32>
    %c0_101 = arith.constant 0 : index
    %c0_102 = arith.constant 0 : index
    %179 = vector.load %arg12[%c0_101, %c0_102] : memref<1x32xf32, #tpu.memory_space<vmem>>, vector<1x32xf32>
    %180 = vector.broadcast %179 : vector<1x32xf32> to vector<8x32xf32>
    %181 = arith.mulf %178, %180 : vector<8x32xf32>
    %c0_103 = arith.constant 0 : index
    %c0_104 = arith.constant 0 : index
    %182 = vector.load %arg13[%c0_103, %c0_104] : memref<1x32xf32, #tpu.memory_space<vmem>>, vector<1x32xf32>
    %183 = vector.broadcast %182 : vector<1x32xf32> to vector<8x32xf32>
    %184 = arith.addf %181, %183 : vector<8x32xf32>
    %c0_105 = arith.constant 0 : index
    %c0_106 = arith.constant 0 : index
    %c0_107 = arith.constant 0 : index
    %185 = vector.load %arg14[%c0_105, %c0_106, %c0_107] : memref<1x8x32xf32, #tpu.memory_space<vmem>>, vector<1x8x32xf32>
    %186 = vector.shape_cast %185 : vector<1x8x32xf32> to vector<8x32xf32>
    %187 = vector.shape_cast %184 : vector<8x32xf32> to vector<1x8x32xf32>
    tpu.vector_store %arg14[%c0_105, %c0_106, %c0_107], %187 {strides = array<i32>} : memref<1x8x32xf32, #tpu.memory_space<vmem>>, vector<1x8x32xf32>,
    return
  }
  func.func @transform_0(%arg0: i32, %arg1: i32) -> (i32, i32, i32) {
    %c0_i32 = arith.constant 0 : i32
    %c0_i32_0 = arith.constant 0 : i32
    return %arg0, %arg1, %c0_i32 : i32, i32, i32
  }
  func.func @transform_1(%arg0: i32, %arg1: i32) -> (i32, i32, i32) {
    %c0_i32 = arith.constant 0 : i32
    %c0_i32_0 = arith.constant 0 : i32
    %c0_i32_1 = arith.constant 0 : i32
    return %arg0, %c0_i32, %c0_i32_0 : i32, i32, i32
  }
  func.func @transform_2(%arg0: i32, %arg1: i32) -> (i32, i32) {
    %c0_i32 = arith.constant 0 : i32
    %c0_i32_0 = arith.constant 0 : i32
    %c0_i32_1 = arith.constant 0 : i32
    return %c0_i32, %c0_i32_0 : i32, i32
  }
  func.func @transform_3(%arg0: i32, %arg1: i32) -> (i32, i32) {
    %c0_i32 = arith.constant 0 : i32
    %c0_i32_0 = arith.constant 0 : i32
    %c0_i32_1 = arith.constant 0 : i32
    return %c0_i32, %c0_i32_0 : i32, i32
  }
  func.func @transform_4(%arg0: i32, %arg1: i32) -> (i32, i32) {
    %c0_i32 = arith.constant 0 : i32
    %c0_i32_0 = arith.constant 0 : i32
    %c0_i32_1 = arith.constant 0 : i32
    return %c0_i32, %c0_i32_0 : i32, i32
  }
  func.func @transform_5(%arg0: i32, %arg1: i32) -> (i32, i32) {
    %c0_i32 = arith.constant 0 : i32
    %c0_i32_0 = arith.constant 0 : i32
    %c0_i32_1 = arith.constant 0 : i32
    return %c0_i32, %c0_i32_0 : i32, i32
  }
  func.func @transform_6(%arg0: i32, %arg1: i32) -> (i32, i32) {
    %c0_i32 = arith.constant 0 : i32
    %c0_i32_0 = arith.constant 0 : i32
    %c0_i32_1 = arith.constant 0 : i32
    return %c0_i32, %c0_i32_0 : i32, i32
  }
  func.func @transform_7(%arg0: i32, %arg1: i32) -> (i32, i32) {
    %c0_i32 = arith.constant 0 : i32
    %c0_i32_0 = arith.constant 0 : i32
    %c0_i32_1 = arith.constant 0 : i32
    return %c0_i32, %c0_i32_0 : i32, i32
  }
  func.func @transform_8(%arg0: i32, %arg1: i32) -> (i32, i32, i32) {
    %c0_i32 = arith.constant 0 : i32
    %c0_i32_0 = arith.constant 0 : i32
    %c0_i32_1 = arith.constant 0 : i32
    %c0_i32_2 = arith.constant 0 : i32
    return %c0_i32, %c0_i32_0, %c0_i32_1 : i32, i32, i32
  }
  func.func @transform_9(%arg0: i32, %arg1: i32) -> (i32, i32) {
    %c0_i32 = arith.constant 0 : i32
    %c0_i32_0 = arith.constant 0 : i32
    %c0_i32_1 = arith.constant 0 : i32
    return %c0_i32, %c0_i32_0 : i32, i32
  }
  func.func @transform_10(%arg0: i32, %arg1: i32) -> (i32, i32) {
    %c0_i32 = arith.constant 0 : i32
    %c0_i32_0 = arith.constant 0 : i32
    %c0_i32_1 = arith.constant 0 : i32
    return %c0_i32, %c0_i32_0 : i32, i32
  }
  func.func @transform_11(%arg0: i32, %arg1: i32) -> (i32, i32) {
    %c0_i32 = arith.constant 0 : i32
    %c0_i32_0 = arith.constant 0 : i32
    %c0_i32_1 = arith.constant 0 : i32
    return %c0_i32, %c0_i32_0 : i32, i32
  }
  func.func @transform_12(%arg0: i32, %arg1: i32) -> (i32, i32, i32) {
    %c0_i32 = arith.constant 0 : i32
    %c0_i32_0 = arith.constant 0 : i32
    return %arg0, %arg1, %c0_i32 : i32, i32, i32
  }
}

</mosaic_0001>

<llo_original>
// kernel: decoder_forward.13
$region0: #{decoder_forward.13}
  #allocation0 [shape = 'u32[]', space=smem, size = 0x4, offset = 0x4, fixed_abs, tag = 'smem constant byte address 0x4 - core index']
  #allocation1 [shape = 'u32[144,128]{1,0:T(1,128)}', space=vmem, size = 0x12000, scoped, tag = 'internal scratch']
  %s0 = inlined_call_operand.vmem [shape: f32[16,32], index: 0, kind: input, shape index: {}]
  %s1 = inlined_call_operand.vmem [shape: bf16[32,128], index: 1, kind: input, shape index: {}]
  %s2 = inlined_call_operand.vmem [shape: f32[1,128], index: 2, kind: input, shape index: {}]
  %s3 = inlined_call_operand.hbm [shape: f32[16,128], index: 3, kind: output, shape index: {}]
  %s4 = sld [smem:[#allocation0]]
  $region22: #{decoder_forward.13} parent=0
    _
  %s6 = ssub.s32 1, %s4
  %s7 = scalar_select 0, %s6, %s4
  $region1: #{decoder_forward.13} parent=0
    #allocation2 [shape = 'u8[8192]{0}', space=vmem, size = 0x2000, scoped, tag = 'output window, operand 0, single buffered']
    #allocation3 [shape = 's32[1]{0}', space=sflag, size = 0x4, scoped, tag = 'scoped memory for decoder_forward.13']
    %8 = vsyncpa [#allocation3], 0
    // Predicated region
    $region2: #{decoder_forward.13} parent=1 // pred_check
      _
    $region3: #{decoder_forward.13} parent=1 // pred_check_branch
      %10 = sbr.rel (0) target = $region5
    $region4: #{decoder_forward.13} parent=1 // pred_region
      _
    $region5: #{decoder_forward.13} parent=1 // pred_fallthru
      _
    // Predicated region
    $region6: #{decoder_forward.13} parent=1 // pred_check
      _
    $region7: #{decoder_forward.13} parent=1 // pred_check_branch
      %12 = sbr.rel (0) target = $region9
    $region8: #{decoder_forward.13} parent=1 // pred_region
      _
    $region9: #{decoder_forward.13} parent=1 // pred_fallthru
      _
    // Predicated region
    $region10: #{decoder_forward.13} parent=1 // pred_check
      _
    $region11: #{decoder_forward.13} parent=1 // pred_check_branch
      %14 = sbr.rel (0) target = $region13
    $region12: #{decoder_forward.13} parent=1 // pred_region
      _
    $region13: #{decoder_forward.13} parent=1 // pred_fallthru
      _
    %v16 = vld [vmem:[%s0] sm:$0xff]
    %v17 = vld [vmem:[%s0 + $0x8] sm:$0xff]
    %v18 = vpack.c.bf16 %v17, %v16
    %v19 = vld [vmem:[%s1] sm:$0xf]
    %v20 = vld [vmem:[%s1 + $0x4] sm:$0xf]
    %v21 = vld [vmem:[%s1 + $0x8] sm:$0xf]
    %v22 = vld [vmem:[%s1 + $0xc] sm:$0xf]
    %v23 = vld [vmem:[%s2] sm:$0x1]
    %v25 = vlaneseq
    %v26 = vshrl.u32 %v25, 7
    %v27 = vsub.s32 0, %v26
    %v28 = vrot.slane %v23, %v27
    %v34 = vunpack.c.l.b16 %v19
    %v35 = vunpack.c.l.b16 %v20
    %v36 = vunpack.c.l.b16 %v21
    %v37 = vunpack.c.l.b16 %v22
    %v38 = vpack.c.b16 %v35, %v34
    %v39 = vpack.c.b16 %v37, %v36
    %vm42 = vcmask 261120
    %v44 = vsel %vm42, %v18, 0
    %46 = vmatprep.subr.bf16.mxu0 0
    %47 = vmatpush1.bf16.msra.mxu0 %v38
    %48 = vmatprep.subr.bf16.mxu0 0
    %49 = vmatpush1.bf16.msra.mxu0 %v39
    %50 = vmatprep.subr.bf16.mxu0 0
    %51 = vmatpush1.bf16.msra.mxu0 0
    %52 = vmatprep.subr.bf16.mxu0 0
    %53 = vmatpush1.bf16.msra.mxu0 0
    %54 = vmatprep.subr.bf16.mxu0 0
    %55 = vmatpush1.bf16.msra.mxu0 0
    %56 = vmatprep.subr.bf16.mxu0 0
    %57 = vmatpush1.bf16.msra.mxu0 0
    %58 = vmatprep.subr.bf16.mxu0 0
    %59 = vmatpush1.bf16.msra.mxu0 0
    %60 = vmatprep.subr.bf16.mxu0 0
    %61 = vmatpush1.bf16.msra.mxu0 0
    %62 = vmatprep.subr.bf16.mxu0 0
    %63 = vmatpush1.bf16.msra.mxu0 0
    %64 = vmatprep.subr.bf16.mxu0 0
    %65 = vmatpush1.bf16.msra.mxu0 0
    %66 = vmatprep.subr.bf16.mxu0 0
    %67 = vmatpush1.bf16.msra.mxu0 0
    %68 = vmatprep.subr.bf16.mxu0 0
    %69 = vmatpush1.bf16.msra.mxu0 0
    %70 = vmatprep.subr.bf16.mxu0 0
    %71 = vmatpush1.bf16.msra.mxu0 0
    %72 = vmatprep.subr.bf16.mxu0 0
    %73 = vmatpush1.bf16.msra.mxu0 0
    %74 = vmatprep.subr.bf16.mxu0 0
    %75 = vmatpush1.bf16.msra.mxu0 0
    %76 = vmatprep.subr.bf16.mxu0 0
    %77 = vmatpush1.bf16.msra.mxu0 0
    %78 = vmatprep.mubr.bf16.mxu0 0
    %79 = vmatmul.mubr.bf16.gmra.mrb[0].mxu0 %v44
    %v80 = vpop.f32.mrb[0].mxu0
    %v81 = vadd.f32 %v28, %v80
    %v82 = vpop.f32.mrb[0].mxu0
    %v83 = vpop.f32.mrb[0].mxu0
    %v84 = vadd.f32 %v28, %v83
    %v85 = vpop.f32.mrb[0].mxu0
    %86 = vdwg.mxu0
    %87 = vst [vmem:[#allocation2] sm:$0xff] %v81
    %88 = vst [vmem:[#allocation2 + $0x8] sm:$0xff] %v84
    // Predicated region
    $region14: #{decoder_forward.13} parent=1 // pred_check
      _
    $region15: #{decoder_forward.13} parent=1 // pred_check_branch
      %90 = sbr.rel (0) target = $region17
    $region16: #{decoder_forward.13} parent=1 // pred_region
      %s92 = ssub.s32 256, 256
      %93 = vsyncadd [#allocation3], %s92
      %s94 = sshll.u32 [#allocation2], 4
      %s95 = int_to_ptr.vmem [resolvable:$true] %s94
      %100 = dma.vmem_to_hbm [thread:$0]  %s95, 256, %s3, [#allocation3], 128, 128, 8
    $region17: #{decoder_forward.13} parent=1 // pred_fallthru
      _
    // Predicated region
    $region18: #{decoder_forward.13} parent=1 // pred_check
      _
    $region19: #{decoder_forward.13} parent=1 // pred_check_branch
      %102 = sbr.rel (0) target = $region21
    $region20: #{decoder_forward.13} parent=1 // pred_region
      %103 = dma.done [#allocation3], 256
    $region21: #{decoder_forward.13} parent=1 // pred_fallthru
      _
    %104 = vsyncpa [#allocation3], 1

// kernel: decoder_forward.9
$region0: #{decoder_forward.9}
  #allocation0 [shape = 'u32[]', space=smem, size = 0x4, offset = 0x4, fixed_abs, tag = 'smem constant byte address 0x4 - core index']
  #allocation1 [shape = 'u32[144,128]{1,0:T(1,128)}', space=vmem, size = 0x12000, scoped, tag = 'internal scratch']
  #allocation2 [shape = 'f32[16,32]{1,0:T(8,128)}', space=vmem, size = 0x2000, scoped, tag = 'scratch operand']
  %s0 = inlined_call_operand.vmem [shape: f32[16,32], index: 0, kind: input, shape index: {}]
  %s1 = inlined_call_operand.vmem [shape: bf16[32,128], index: 1, kind: input, shape index: {}]
  %s2 = inlined_call_operand.vmem [shape: f32[1,128], index: 2, kind: input, shape index: {}]
  %s3 = inlined_call_operand.vmem [shape: bf16[128,32], index: 3, kind: input, shape index: {}]
  %s4 = inlined_call_operand.vmem [shape: f32[1,32], index: 4, kind: input, shape index: {}]
  %s5 = inlined_call_operand.vmem [shape: f32[1,32], index: 5, kind: input, shape index: {}]
  %s6 = inlined_call_operand.vmem [shape: f32[16,32], index: 6, kind: output, shape index: {}]
  %s7 = sld [smem:[#allocation0]]
  $region42: #{decoder_forward.9} parent=0
    _
  %s9 = ssub.s32 1, %s7
  %s10 = scalar_select 0, %s9, %s7
  // Predicated region
  $region2: #{decoder_forward.9} parent=0 // pred_check
    _
  $region3: #{decoder_forward.9} parent=0 // pred_check_branch
    %12 = sbr.rel (0) target = $region5
  $region4: #{decoder_forward.9} parent=0 // pred_region
    _
  $region5: #{decoder_forward.9} parent=0 // pred_fallthru
    _
  // Predicated region
  $region6: #{decoder_forward.9} parent=0 // pred_check
    _
  $region7: #{decoder_forward.9} parent=0 // pred_check_branch
    %14 = sbr.rel (0) target = $region9
  $region8: #{decoder_forward.9} parent=0 // pred_region
    _
  $region9: #{decoder_forward.9} parent=0 // pred_fallthru
    _
  // Predicated region
  $region10: #{decoder_forward.9} parent=0 // pred_check
    _
  $region11: #{decoder_forward.9} parent=0 // pred_check_branch
    %16 = sbr.rel (0) target = $region13
  $region12: #{decoder_forward.9} parent=0 // pred_region
    _
  $region13: #{decoder_forward.9} parent=0 // pred_fallthru
    _
  // Predicated region
  $region14: #{decoder_forward.9} parent=0 // pred_check
    _
  $region15: #{decoder_forward.9} parent=0 // pred_check_branch
    %18 = sbr.rel (0) target = $region17
  $region16: #{decoder_forward.9} parent=0 // pred_region
    _
  $region17: #{decoder_forward.9} parent=0 // pred_fallthru
    _
  // Predicated region
  $region18: #{decoder_forward.9} parent=0 // pred_check
    _
  $region19: #{decoder_forward.9} parent=0 // pred_check_branch
    %20 = sbr.rel (0) target = $region21
  $region20: #{decoder_forward.9} parent=0 // pred_region
    _
  $region21: #{decoder_forward.9} parent=0 // pred_fallthru
    _
  // Predicated region
  $region22: #{decoder_forward.9} parent=0 // pred_check
    _
  $region23: #{decoder_forward.9} parent=0 // pred_check_branch
    %22 = sbr.rel (0) target = $region25
  $region24: #{decoder_forward.9} parent=0 // pred_region
    _
  $region25: #{decoder_forward.9} parent=0 // pred_fallthru
    _
  %p24 = scmp.eq.s32.totalorder 0, 0
  // Predicated region
  $region26: #{decoder_forward.9} parent=0 // pred_check
    %p25 = pneg %p24
  $region27: #{decoder_forward.9} parent=0 // pred_check_branch
    %27 = sbr.rel (%p25) target = $region29
  $region28: #{decoder_forward.9} parent=0 // pred_region
    %vm28 = vcmask 261120
    %29 = vst.msk [vmem:[#allocation2] sm:$0xff] %vm28, 0.0
    %30 = vst.msk [vmem:[#allocation2 + $0x8] sm:$0xff] %vm28, 0.0
  $region29: #{decoder_forward.9} parent=0 // pred_fallthru
    _
  %v31 = vld [vmem:[%s0] sm:$0xff]
  %v32 = vld [vmem:[%s0 + $0x8] sm:$0xff]
  %v33 = vpack.c.bf16 %v32, %v31
  %v34 = vld [vmem:[%s1] sm:$0xf]
  %v35 = vld [vmem:[%s1 + $0x4] sm:$0xf]
  %v36 = vld [vmem:[%s1 + $0x8] sm:$0xf]
  %v37 = vld [vmem:[%s1 + $0xc] sm:$0xf]
  %v38 = vld [vmem:[%s2] sm:$0x1]
  %v40 = vlaneseq
  %v41 = vshrl.u32 %v40, 7
  %v42 = vsub.s32 0, %v41
  %v43 = vrot.slane %v38, %v42
  %v49 = vunpack.c.l.b16 %v34
  %v50 = vunpack.c.l.b16 %v35
  %v51 = vunpack.c.l.b16 %v36
  %v52 = vunpack.c.l.b16 %v37
  %v53 = vpack.c.b16 %v50, %v49
  %v54 = vpack.c.b16 %v52, %v51
  %vm57 = vcmask 261120
  %v59 = vsel %vm57, %v33, 0
  %61 = vmatprep.subr.bf16.mxu0 0
  %62 = vmatpush1.bf16.msra.mxu0 %v53
  %63 = vmatprep.subr.bf16.mxu0 0
  %64 = vmatpush1.bf16.msra.mxu0 %v54
  %65 = vmatprep.subr.bf16.mxu0 0
  %66 = vmatpush1.bf16.msra.mxu0 0
  %67 = vmatprep.subr.bf16.mxu0 0
  %68 = vmatpush1.bf16.msra.mxu0 0
  %69 = vmatprep.subr.bf16.mxu0 0
  %70 = vmatpush1.bf16.msra.mxu0 0
  %71 = vmatprep.subr.bf16.mxu0 0
  %72 = vmatpush1.bf16.msra.mxu0 0
  %73 = vmatprep.subr.bf16.mxu0 0
  %74 = vmatpush1.bf16.msra.mxu0 0
  %75 = vmatprep.subr.bf16.mxu0 0
  %76 = vmatpush1.bf16.msra.mxu0 0
  %77 = vmatprep.subr.bf16.mxu0 0
  %78 = vmatpush1.bf16.msra.mxu0 0
  %79 = vmatprep.subr.bf16.mxu0 0
  %80 = vmatpush1.bf16.msra.mxu0 0
  %81 = vmatprep.subr.bf16.mxu0 0
  %82 = vmatpush1.bf16.msra.mxu0 0
  %83 = vmatprep.subr.bf16.mxu0 0
  %84 = vmatpush1.bf16.msra.mxu0 0
  %85 = vmatprep.subr.bf16.mxu0 0
  %86 = vmatpush1.bf16.msra.mxu0 0
  %87 = vmatprep.subr.bf16.mxu0 0
  %88 = vmatpush1.bf16.msra.mxu0 0
  %89 = vmatprep.subr.bf16.mxu0 0
  %90 = vmatpush1.bf16.msra.mxu0 0
  %91 = vmatprep.subr.bf16.mxu0 0
  %92 = vmatpush1.bf16.msra.mxu0 0
  %93 = vmatprep.mubr.bf16.mxu0 0
  %94 = vmatmul.mubr.bf16.gmra.mrb[0].mxu0 %v59
  %v95 = vpop.f32.mrb[0].mxu0
  %v96 = vadd.f32 %v43, %v95
  %v97 = vpop.f32.mrb[0].mxu0
  %v98 = vpop.f32.mrb[0].mxu0
  %v99 = vadd.f32 %v43, %v98
  %v100 = vpop.f32.mrb[0].mxu0
  %101 = vdwg.mxu0
  %v102 = vmul.f32 %v96, 0.5
  %v103 = vmul.f32 %v99, 0.5
  %v104 = vmul.f32 %v96, 0.044715
  %v105 = vmul.f32 %v99, 0.044715
  %v106 = vmul.f32 %v104, %v96
  %v107 = vmul.f32 %v105, %v99
  %v108 = vmul.f32 %v106, %v96
  %v109 = vmul.f32 %v107, %v99
  %v110 = vadd.f32 %v96, %v108
  %v111 = vadd.f32 %v99, %v109
  %v112 = vmul.f32 %v110, 0.7978846
  %v113 = vmul.f32 %v111, 0.7978846
  %v114 = vtanh.pop %v112
  %v115 = vtanh.pop %v113
  %v116 = vadd.f32 %v114, 1.0
  %v117 = vadd.f32 %v115, 1.0
  %v118 = vmul.f32 %v102, %v116
  %v119 = vmul.f32 %v103, %v117
  %v120 = vld [vmem:[#allocation2] sm:$0xff]
  %v121 = vld [vmem:[#allocation2 + $0x8] sm:$0xff]
  %v122 = vpack.c.bf16 %v119, %v118
  %v123 = vld [vmem:[%s3] sm:$0xf]
  %v124 = vld [vmem:[%s3 + $0x4] sm:$0xf]
  %v125 = vld [vmem:[%s3 + $0x8] sm:$0xf]
  %v126 = vld [vmem:[%s3 + $0xc] sm:$0xf]
  %v127 = vld [vmem:[%s3 + $0x10] sm:$0xf]
  %v128 = vld [vmem:[%s3 + $0x14] sm:$0xf]
  %v129 = vld [vmem:[%s3 + $0x18] sm:$0xf]
  %v130 = vld [vmem:[%s3 + $0x1c] sm:$0xf]
  %v131 = vld [vmem:[%s3 + $0x20] sm:$0xf]
  %v132 = vld [vmem:[%s3 + $0x24] sm:$0xf]
  %v133 = vld [vmem:[%s3 + $0x28] sm:$0xf]
  %v134 = vld [vmem:[%s3 + $0x2c] sm:$0xf]
  %v135 = vld [vmem:[%s3 + $0x30] sm:$0xf]
  %v136 = vld [vmem:[%s3 + $0x34] sm:$0xf]
  %v137 = vld [vmem:[%s3 + $0x38] sm:$0xf]
  %v138 = vld [vmem:[%s3 + $0x3c] sm:$0xf]
  %v155 = vunpack.c.l.b16 %v123
  %v156 = vunpack.c.l.b16 %v124
  %v157 = vunpack.c.l.b16 %v125
  %v158 = vunpack.c.l.b16 %v126
  %v159 = vunpack.c.l.b16 %v127
  %v160 = vunpack.c.l.b16 %v128
  %v161 = vunpack.c.l.b16 %v129
  %v162 = vunpack.c.l.b16 %v130
  %v163 = vunpack.c.l.b16 %v131
  %v164 = vunpack.c.l.b16 %v132
  %v165 = vunpack.c.l.b16 %v133
  %v166 = vunpack.c.l.b16 %v134
  %v167 = vunpack.c.l.b16 %v135
  %v168 = vunpack.c.l.b16 %v136
  %v169 = vunpack.c.l.b16 %v137
  %v170 = vunpack.c.l.b16 %v138
  %v171 = vpack.c.b16 %v156, %v155
  %v172 = vpack.c.b16 %v158, %v157
  %v173 = vpack.c.b16 %v160, %v159
  %v174 = vpack.c.b16 %v162, %v161
  %v175 = vpack.c.b16 %v164, %v163
  %v176 = vpack.c.b16 %v166, %v165
  %v177 = vpack.c.b16 %v168, %v167
  %v178 = vpack.c.b16 %v170, %v169
  %187 = vmatprep.subr.bf16.mxu0 0
  %188 = vmatpush1.bf16.msra.mxu0 %v171
  %189 = vmatprep.subr.bf16.mxu0 0
  %190 = vmatpush1.bf16.msra.mxu0 %v172
  %191 = vmatprep.subr.bf16.mxu0 0
  %192 = vmatpush1.bf16.msra.mxu0 %v173
  %193 = vmatprep.subr.bf16.mxu0 0
  %194 = vmatpush1.bf16.msra.mxu0 %v174
  %195 = vmatprep.subr.bf16.mxu0 0
  %196 = vmatpush1.bf16.msra.mxu0 %v175
  %197 = vmatprep.subr.bf16.mxu0 0
  %198 = vmatpush1.bf16.msra.mxu0 %v176
  %199 = vmatprep.subr.bf16.mxu0 0
  %200 = vmatpush1.bf16.msra.mxu0 %v177
  %201 = vmatprep.subr.bf16.mxu0 0
  %202 = vmatpush1.bf16.msra.mxu0 %v178
  %203 = vmatprep.subr.bf16.mxu0 0
  %204 = vmatpush1.bf16.msra.mxu0 0
  %205 = vmatprep.subr.bf16.mxu0 0
  %206 = vmatpush1.bf16.msra.mxu0 0
  %207 = vmatprep.subr.bf16.mxu0 0
  %208 = vmatpush1.bf16.msra.mxu0 0
  %209 = vmatprep.subr.bf16.mxu0 0
  %210 = vmatpush1.bf16.msra.mxu0 0
  %211 = vmatprep.subr.bf16.mxu0 0
  %212 = vmatpush1.bf16.msra.mxu0 0
  %213 = vmatprep.subr.bf16.mxu0 0
  %214 = vmatpush1.bf16.msra.mxu0 0
  %215 = vmatprep.subr.bf16.mxu0 0
  %216 = vmatpush1.bf16.msra.mxu0 0
  %217 = vmatprep.subr.bf16.mxu0 0
  %218 = vmatpush1.bf16.msra.mxu0 0
  %219 = vmatprep.mubr.bf16.mxu0 0
  %220 = vmatmul.mubr.bf16.gmra.mrb[0].mxu0 %v122
  %v221 = vpop.f32.mrb[0].mxu0
  %v222 = vadd.f32 0.0, %v221
  %v223 = vpop.f32.mrb[0].mxu0
  %v224 = vpop.f32.mrb[0].mxu0
  %v225 = vadd.f32 0.0, %v224
  %v226 = vpop.f32.mrb[0].mxu0
  %227 = vdwg.mxu0
  %v228 = vadd.f32 %v120, %v222
  %v229 = vadd.f32 %v121, %v225
  %230 = vst.msk [vmem:[#allocation2] sm:$0xff] %vm57, %v228
  %231 = vst.msk [vmem:[#allocation2 + $0x8] sm:$0xff] %vm57, %v229
  // Predicated region
  $region30: #{decoder_forward.9} parent=0 // pred_check
    %p232 = pneg %p24
  $region31: #{decoder_forward.9} parent=0 // pred_check_branch
    %234 = sbr.rel (%p232) target = $region33
  $region32: #{decoder_forward.9} parent=0 // pred_region
    %v235 = vld [vmem:[#allocation2] sm:$0xff]
    %v236 = vld [vmem:[#allocation2 + $0x8] sm:$0xff]
    %v237 = vadd.f32 %v235, %v31
    %v238 = vadd.f32 %v236, %v32
    %v239 = vsel %vm57, %v237, 0.0
    %240 = vadd.xlane.f32.xlu0 %v239
    %v241 = vpop.xlane.xlu0 %240
    %v242 = vsel %vm57, %v238, 0.0
    %243 = vadd.xlane.f32.xlu0 %v242
    %v244 = vpop.xlane.xlu0 %243
    %v245 = vrcp.pop 32.0
    %v246 = vmul.f32 %v241, %v245
    %v247 = vmul.f32 %v244, %v245
    %v248 = vsub.f32 %v237, %v246
    %v249 = vsub.f32 %v238, %v247
    %v250 = vmul.f32 %v248, %v248
    %v251 = vmul.f32 %v249, %v249
    %v252 = vsel %vm57, %v250, 0.0
    %253 = vadd.xlane.f32.xlu0 %v252
    %v254 = vpop.xlane.xlu0 %253
    %v255 = vsel %vm57, %v251, 0.0
    %256 = vadd.xlane.f32.xlu0 %v255
    %v257 = vpop.xlane.xlu0 %256
    %v258 = vmul.f32 %v254, %v245
    %v259 = vmul.f32 %v257, %v245
    %v260 = vadd.f32 %v258, 1e-06
    %v261 = vadd.f32 %v259, 1e-06
    %v262 = vrsqrt.pop %v260
    %v263 = vrsqrt.pop %v261
    %v264 = vmul.f32 %v248, %v262
    %v265 = vmul.f32 %v249, %v263
    %v266 = vld [vmem:[%s4] sm:$0x1]
    %v268 = vlaneseq
    %v269 = vshrl.u32 %v268, 7
    %v270 = vsub.s32 0, %v269
    %v271 = vrot.slane %v266, %v270
    %v273 = vmul.f32 %v264, %v271
    %v274 = vmul.f32 %v265, %v271
    %v275 = vld [vmem:[%s5] sm:$0x1]
    %v277 = vlaneseq
    %v278 = vshrl.u32 %v277, 7
    %v279 = vsub.s32 0, %v278
    %v280 = vrot.slane %v275, %v279
    %v282 = vadd.f32 %v273, %v280
    %v283 = vadd.f32 %v274, %v280
    %284 = vst.msk [vmem:[%s6] sm:$0xff] %vm57, %v282
    %285 = vst.msk [vmem:[%s6 + $0x8] sm:$0xff] %vm57, %v283
  $region33: #{decoder_forward.9} parent=0 // pred_fallthru
    _
  // Predicated region
  $region34: #{decoder_forward.9} parent=0 // pred_check
    _
  $region35: #{decoder_forward.9} parent=0 // pred_check_branch
    %287 = sbr.rel (0) target = $region37
  $region36: #{decoder_forward.9} parent=0 // pred_region
    _
  $region37: #{decoder_forward.9} parent=0 // pred_fallthru
    _
  // Predicated region
  $region38: #{decoder_forward.9} parent=0 // pred_check
    _
  $region39: #{decoder_forward.9} parent=0 // pred_check_branch
    %289 = sbr.rel (0) target = $region41
  $region40: #{decoder_forward.9} parent=0 // pred_region
    _
  $region41: #{decoder_forward.9} parent=0 // pred_fallthru
    _

// kernel: decoder_forward.7
$region0: #{decoder_forward.7}
  #allocation0 [shape = 'u32[]', space=smem, size = 0x4, offset = 0x4, fixed_abs, tag = 'smem constant byte address 0x4 - core index']
  #allocation1 [shape = 'u32[144,128]{1,0:T(1,128)}', space=vmem, size = 0x12000, scoped, tag = 'internal scratch']
  %s0 = inlined_call_operand.vmem [shape: f32[2,8,32], index: 0, kind: input, shape index: {}, may-alias: {0,1}]
  %s1 = inlined_call_operand.vmem [shape: f32[2,8,32], index: 1, kind: input, shape index: {}, may-alias: {0,1}]
  %s2 = inlined_call_operand.vmem [shape: bf16[8,8], index: 2, kind: input, shape index: {}]
  %s3 = inlined_call_operand.vmem [shape: f32[1,8], index: 3, kind: input, shape index: {}]
  %s4 = inlined_call_operand.vmem [shape: bf16[8,8], index: 4, kind: input, shape index: {}]
  %s5 = inlined_call_operand.vmem [shape: f32[1,8], index: 5, kind: input, shape index: {}]
  %s6 = inlined_call_operand.vmem [shape: bf16[8,8], index: 6, kind: input, shape index: {}]
  %s7 = inlined_call_operand.vmem [shape: f32[1,8], index: 7, kind: input, shape index: {}]
  %s8 = inlined_call_operand.vmem [shape: bf16[4,8,32], index: 8, kind: input, shape index: {}]
  %s9 = inlined_call_operand.vmem [shape: f32[1,32], index: 9, kind: input, shape index: {}]
  %s10 = inlined_call_operand.vmem [shape: f32[1,32], index: 10, kind: input, shape index: {}]
  %s11 = inlined_call_operand.vmem [shape: f32[1,32], index: 11, kind: input, shape index: {}]
  %s12 = inlined_call_operand.vmem [shape: f32[2,8,32], index: 12, kind: output, shape index: {}]
  %s13 = sld [smem:[#allocation0]]
  $region81: #{decoder_forward.7} parent=0
    _
  %s15 = ssub.s32 1, %s13
  %s16 = scalar_select 0, %s15, %s13
  loop: start=0, step=1, limit=4
  $region2: #{decoder_forward.7} parent=0 // loop_pre_header
    _
  $region3: #{decoder_forward.7} parent=0 // loop_header
    %s18 = sphi 0, %s22
    %p19 = scmp.ge.s32.totalorder %s18, 4
    %s25 = sphi 0, %s37
    %s26 = sphi 0, %s33
    %s27 = sphi 0, %s25
    %s28 = sphi 0, %s26
    %s29 = sphi 0, %s27
    %s30 = sphi 0, %s28
    %s42 = sphi 0, %s44
    %s45 = sphi 0, %s42
    %s46 = sphi 0, %s45
    %s62 = sphi 0, %s46
    %s68 = sphi 0, %s70
    %s71 = sphi 0, %s68
    %s72 = sphi 0, %s71
    %s88 = sphi 0, %s72
    %s92 = sphi 0, %s92
    %s94 = sphi 0, %s92
    %s95 = sphi 0, %s94
    %s109 = sphi 0, %s95
    %s113 = sphi 0, %s113
    %s115 = sphi 0, %s113
    %s116 = sphi 0, %s115
    %s130 = sphi 0, %s116
    %s134 = sphi 0, %s134
    %s136 = sphi 0, %s134
    %s137 = sphi 0, %s136
    %s151 = sphi 0, %s137
    %s155 = sphi 0, %s155
    %s157 = sphi 0, %s155
    %s158 = sphi 0, %s157
    %s172 = sphi 0, %s158
    %s176 = sphi 0, %s176
    %s178 = sphi 0, %s176
    %s179 = sphi 0, %s178
    %s193 = sphi 0, %s179
    %s197 = sphi 0, %s197
    %s199 = sphi 0, %s197
    %s200 = sphi 0, %s199
    %s214 = sphi 0, %s200
    %s218 = sphi 0, %s218
    %s220 = sphi 0, %s218
    %s221 = sphi 0, %s220
    %s235 = sphi 0, %s221
    %s239 = sphi 0, %s239
    %s241 = sphi 0, %s239
    %s242 = sphi 0, %s241
    %s256 = sphi 0, %s242
    %s260 = sphi 0, %s260
    %s262 = sphi 0, %s260
    %s263 = sphi 0, %s262
    %s277 = sphi 0, %s263
    %s281 = sphi 0, %s281
    %s283 = sphi 0, %s281
    %s284 = sphi 0, %s283
    %s298 = sphi 0, %s284
    %s306 = sphi 0, %s308
    %s309 = sphi 0, %s306
    %s310 = sphi 0, %s309
    %s326 = sphi 0, %s310
  $region4: #{decoder_forward.7} parent=0 // loop_header_branch
    %21 = sbr.rel (%p19) target = $region8
  $region5: #{decoder_forward.7} parent=0 // loop_body
    %s23 = ssub.s32 %s18, 1
    %s24 = ssub.s32 %s18, 2
    %s31 = sadd.s32 1, %s26
    %p32 = scmp.ge.s32.totalorder %s31, 1
    %s33 = scalar_select %p32, 0, %s31
    %s34 = sadd.s32 1, %s25
    %s35 = scalar_select %p32, %s34, %s25
    %p36 = scmp.ge.s32.totalorder %s35, 2
    %s37 = scalar_select %p36, 0, %s35
    %s38 = ssub.s32 %s25, %s37
    %s39 = ssub.s32 %s26, %s33
    %s40 = sor.u32 %s38, %s39
    %p41 = scmp.eq.s32.totalorder %s40, 0
    %s43 = sadd.s32 %s42, 1
    %s44 = scalar_select %p41, %s42, %s43
    %p47 = pneg %p41
    %p48 = scmp.eq.s32.totalorder %s18, 1
    %p49 = por %p47, %p48
    %p50 = scmp.ne.s32.totalorder %s42, %s45
    %p51 = scmp.eq.s32.totalorder %s18, 0
    %p52 = por %p50, %p51
    %p53 = scmp.ne.s32.totalorder %s42, %s45
    %p54 = scmp.eq.s32.totalorder %s23, 1
    %p55 = por %p53, %p54
    %p56 = scmp.ne.s32.totalorder %s45, %s46
    %p57 = scmp.eq.s32.totalorder %s23, 0
    %p58 = por %p56, %p57
    %p59 = scmp.ne.s32.totalorder %s45, %s46
    %p60 = scmp.eq.s32.totalorder %s24, 1
    %p61 = por %p59, %p60
    %p63 = scmp.ne.s32.totalorder %s46, %s62
    %p64 = scmp.eq.s32.totalorder %s24, 0
    %p65 = por %p63, %p64
    %s66 = ssub.s32 %s25, %s37
    %p67 = scmp.eq.s32.totalorder %s66, 0
    %s69 = sadd.s32 %s68, 1
    %s70 = scalar_select %p67, %s68, %s69
    %p73 = pneg %p67
    %p74 = scmp.eq.s32.totalorder %s18, 1
    %p75 = por %p73, %p74
    %p76 = scmp.ne.s32.totalorder %s68, %s71
    %p77 = scmp.eq.s32.totalorder %s18, 0
    %p78 = por %p76, %p77
    %p79 = scmp.ne.s32.totalorder %s68, %s71
    %p80 = scmp.eq.s32.totalorder %s23, 1
    %p81 = por %p79, %p80
    %p82 = scmp.ne.s32.totalorder %s71, %s72
    %p83 = scmp.eq.s32.totalorder %s23, 0
    %p84 = por %p82, %p83
    %p85 = scmp.ne.s32.totalorder %s71, %s72
    %p86 = scmp.eq.s32.totalorder %s24, 1
    %p87 = por %p85, %p86
    %p89 = scmp.ne.s32.totalorder %s72, %s88
    %p90 = scmp.eq.s32.totalorder %s24, 0
    %p91 = por %p89, %p90
    %s93 = sadd.s32 %s92, 1
    %p96 = scmp.eq.s32.totalorder %s18, 1
    %p97 = scmp.ne.s32.totalorder %s92, %s94
    %p98 = scmp.eq.s32.totalorder %s18, 0
    %p99 = por %p97, %p98
    %p100 = scmp.ne.s32.totalorder %s92, %s94
    %p101 = scmp.eq.s32.totalorder %s23, 1
    %p102 = por %p100, %p101
    %p103 = scmp.ne.s32.totalorder %s94, %s95
    %p104 = scmp.eq.s32.totalorder %s23, 0
    %p105 = por %p103, %p104
    %p106 = scmp.ne.s32.totalorder %s94, %s95
    %p107 = scmp.eq.s32.totalorder %s24, 1
    %p108 = por %p106, %p107
    %p110 = scmp.ne.s32.totalorder %s95, %s109
    %p111 = scmp.eq.s32.totalorder %s24, 0
    %p112 = por %p110, %p111
    %s114 = sadd.s32 %s113, 1
    %p117 = scmp.eq.s32.totalorder %s18, 1
    %p118 = scmp.ne.s32.totalorder %s113, %s115
    %p119 = scmp.eq.s32.totalorder %s18, 0
    %p120 = por %p118, %p119
    %p121 = scmp.ne.s32.totalorder %s113, %s115
    %p122 = scmp.eq.s32.totalorder %s23, 1
    %p123 = por %p121, %p122
    %p124 = scmp.ne.s32.totalorder %s115, %s116
    %p125 = scmp.eq.s32.totalorder %s23, 0
    %p126 = por %p124, %p125
    %p127 = scmp.ne.s32.totalorder %s115, %s116
    %p128 = scmp.eq.s32.totalorder %s24, 1
    %p129 = por %p127, %p128
    %p131 = scmp.ne.s32.totalorder %s116, %s130
    %p132 = scmp.eq.s32.totalorder %s24, 0
    %p133 = por %p131, %p132
    %s135 = sadd.s32 %s134, 1
    %p138 = scmp.eq.s32.totalorder %s18, 1
    %p139 = scmp.ne.s32.totalorder %s134, %s136
    %p140 = scmp.eq.s32.totalorder %s18, 0
    %p141 = por %p139, %p140
    %p142 = scmp.ne.s32.totalorder %s134, %s136
    %p143 = scmp.eq.s32.totalorder %s23, 1
    %p144 = por %p142, %p143
    %p145 = scmp.ne.s32.totalorder %s136, %s137
    %p146 = scmp.eq.s32.totalorder %s23, 0
    %p147 = por %p145, %p146
    %p148 = scmp.ne.s32.totalorder %s136, %s137
    %p149 = scmp.eq.s32.totalorder %s24, 1
    %p150 = por %p148, %p149
    %p152 = scmp.ne.s32.totalorder %s137, %s151
    %p153 = scmp.eq.s32.totalorder %s24, 0
    %p154 = por %p152, %p153
    %s156 = sadd.s32 %s155, 1
    %p159 = scmp.eq.s32.totalorder %s18, 1
    %p160 = scmp.ne.s32.totalorder %s155, %s157
    %p161 = scmp.eq.s32.totalorder %s18, 0
    %p162 = por %p160, %p161
    %p163 = scmp.ne.s32.totalorder %s155, %s157
    %p164 = scmp.eq.s32.totalorder %s23, 1
    %p165 = por %p163, %p164
    %p166 = scmp.ne.s32.totalorder %s157, %s158
    %p167 = scmp.eq.s32.totalorder %s23, 0
    %p168 = por %p166, %p167
    %p169 = scmp.ne.s32.totalorder %s157, %s158
    %p170 = scmp.eq.s32.totalorder %s24, 1
    %p171 = por %p169, %p170
    %p173 = scmp.ne.s32.totalorder %s158, %s172
    %p174 = scmp.eq.s32.totalorder %s24, 0
    %p175 = por %p173, %p174
    %s177 = sadd.s32 %s176, 1
    %p180 = scmp.eq.s32.totalorder %s18, 1
    %p181 = scmp.ne.s32.totalorder %s176, %s178
    %p182 = scmp.eq.s32.totalorder %s18, 0
    %p183 = por %p181, %p182
    %p184 = scmp.ne.s32.totalorder %s176, %s178
    %p185 = scmp.eq.s32.totalorder %s23, 1
    %p186 = por %p184, %p185
    %p187 = scmp.ne.s32.totalorder %s178, %s179
    %p188 = scmp.eq.s32.totalorder %s23, 0
    %p189 = por %p187, %p188
    %p190 = scmp.ne.s32.totalorder %s178, %s179
    %p191 = scmp.eq.s32.totalorder %s24, 1
    %p192 = por %p190, %p191
    %p194 = scmp.ne.s32.totalorder %s179, %s193
    %p195 = scmp.eq.s32.totalorder %s24, 0
    %p196 = por %p194, %p195
    %s198 = sadd.s32 %s197, 1
    %p201 = scmp.eq.s32.totalorder %s18, 1
    %p202 = scmp.ne.s32.totalorder %s197, %s199
    %p203 = scmp.eq.s32.totalorder %s18, 0
    %p204 = por %p202, %p203
    %p205 = scmp.ne.s32.totalorder %s197, %s199
    %p206 = scmp.eq.s32.totalorder %s23, 1
    %p207 = por %p205, %p206
    %p208 = scmp.ne.s32.totalorder %s199, %s200
    %p209 = scmp.eq.s32.totalorder %s23, 0
    %p210 = por %p208, %p209
    %p211 = scmp.ne.s32.totalorder %s199, %s200
    %p212 = scmp.eq.s32.totalorder %s24, 1
    %p213 = por %p211, %p212
    %p215 = scmp.ne.s32.totalorder %s200, %s214
    %p216 = scmp.eq.s32.totalorder %s24, 0
    %p217 = por %p215, %p216
    %s219 = sadd.s32 %s218, 1
    %p222 = scmp.eq.s32.totalorder %s18, 1
    %p223 = scmp.ne.s32.totalorder %s218, %s220
    %p224 = scmp.eq.s32.totalorder %s18, 0
    %p225 = por %p223, %p224
    %p226 = scmp.ne.s32.totalorder %s218, %s220
    %p227 = scmp.eq.s32.totalorder %s23, 1
    %p228 = por %p226, %p227
    %p229 = scmp.ne.s32.totalorder %s220, %s221
    %p230 = scmp.eq.s32.totalorder %s23, 0
    %p231 = por %p229, %p230
    %p232 = scmp.ne.s32.totalorder %s220, %s221
    %p233 = scmp.eq.s32.totalorder %s24, 1
    %p234 = por %p232, %p233
    %p236 = scmp.ne.s32.totalorder %s221, %s235
    %p237 = scmp.eq.s32.totalorder %s24, 0
    %p238 = por %p236, %p237
    %s240 = sadd.s32 %s239, 1
    %p243 = scmp.eq.s32.totalorder %s18, 1
    %p244 = scmp.ne.s32.totalorder %s239, %s241
    %p245 = scmp.eq.s32.totalorder %s18, 0
    %p246 = por %p244, %p245
    %p247 = scmp.ne.s32.totalorder %s239, %s241
    %p248 = scmp.eq.s32.totalorder %s23, 1
    %p249 = por %p247, %p248
    %p250 = scmp.ne.s32.totalorder %s241, %s242
    %p251 = scmp.eq.s32.totalorder %s23, 0
    %p252 = por %p250, %p251
    %p253 = scmp.ne.s32.totalorder %s241, %s242
    %p254 = scmp.eq.s32.totalorder %s24, 1
    %p255 = por %p253, %p254
    %p257 = scmp.ne.s32.totalorder %s242, %s256
    %p258 = scmp.eq.s32.totalorder %s24, 0
    %p259 = por %p257, %p258
    %s261 = sadd.s32 %s260, 1
    %p264 = scmp.eq.s32.totalorder %s18, 1
    %p265 = scmp.ne.s32.totalorder %s260, %s262
    %p266 = scmp.eq.s32.totalorder %s18, 0
    %p267 = por %p265, %p266
    %p268 = scmp.ne.s32.totalorder %s260, %s262
    %p269 = scmp.eq.s32.totalorder %s23, 1
    %p270 = por %p268, %p269
    %p271 = scmp.ne.s32.totalorder %s262, %s263
    %p272 = scmp.eq.s32.totalorder %s23, 0
    %p273 = por %p271, %p272
    %p274 = scmp.ne.s32.totalorder %s262, %s263
    %p275 = scmp.eq.s32.totalorder %s24, 1
    %p276 = por %p274, %p275
    %p278 = scmp.ne.s32.totalorder %s263, %s277
    %p279 = scmp.eq.s32.totalorder %s24, 0
    %p280 = por %p278, %p279
    %s282 = sadd.s32 %s281, 1
    %p285 = scmp.eq.s32.totalorder %s18, 1
    %p286 = scmp.ne.s32.totalorder %s281, %s283
    %p287 = scmp.eq.s32.totalorder %s18, 0
    %p288 = por %p286, %p287
    %p289 = scmp.ne.s32.totalorder %s281, %s283
    %p290 = scmp.eq.s32.totalorder %s23, 1
    %p291 = por %p289, %p290
    %p292 = scmp.ne.s32.totalorder %s283, %s284
    %p293 = scmp.eq.s32.totalorder %s23, 0
    %p294 = por %p292, %p293
    %p295 = scmp.ne.s32.totalorder %s283, %s284
    %p296 = scmp.eq.s32.totalorder %s24, 1
    %p297 = por %p295, %p296
    %p299 = scmp.ne.s32.totalorder %s284, %s298
    %p300 = scmp.eq.s32.totalorder %s24, 0
    %p301 = por %p299, %p300
    %s302 = ssub.s32 %s25, %s37
    %s303 = ssub.s32 %s26, %s33
    %s304 = sor.u32 %s302, %s303
    %p305 = scmp.eq.s32.totalorder %s304, 0
    %s307 = sadd.s32 %s306, 1
    %s308 = scalar_select %p305, %s306, %s307
    %p311 = pneg %p305
    %p312 = scmp.eq.s32.totalorder %s18, 1
    %p313 = por %p311, %p312
    %p314 = scmp.ne.s32.totalorder %s306, %s309
    %p315 = scmp.eq.s32.totalorder %s18, 0
    %p316 = por %p314, %p315
    %p317 = scmp.ne.s32.totalorder %s306, %s309
    %p318 = scmp.eq.s32.totalorder %s23, 1
    %p319 = por %p317, %p318
    %p320 = scmp.ne.s32.totalorder %s309, %s310
    %p321 = scmp.eq.s32.totalorder %s23, 0
    %p322 = por %p320, %p321
    %p323 = scmp.ne.s32.totalorder %s309, %s310
    %p324 = scmp.eq.s32.totalorder %s24, 1
    %p325 = por %p323, %p324
    %p327 = scmp.ne.s32.totalorder %s310, %s326
    %p328 = scmp.eq.s32.totalorder %s24, 0
    %p329 = por %p327, %p328
    %p330 = scmp.le.s32.totalorder 1, %s18
    %p331 = scmp.lt.s32.totalorder %s18, 3
    %p332 = pnand %p330, %p331
    %p333 = pneg %p332
    // Predicated region
    $region9: #{decoder_forward.7} parent=5 // pred_check
      _
    $region10: #{decoder_forward.7} parent=5 // pred_check_branch
      %335 = sbr.rel (%p332) target = $region12
    $region11: #{decoder_forward.7} parent=5 // pred_region
      %s336 = ssub.s32 %s18, 1
      // Predicated region
      $region13: #{decoder_forward.7} parent=11 // pred_check
        %p337 = pneg %p105
      $region14: #{decoder_forward.7} parent=11 // pred_check_branch
        %339 = sbr.rel (%p337) target = $region16
      $region15: #{decoder_forward.7} parent=11 // pred_region
        _
      $region16: #{decoder_forward.7} parent=11 // pred_fallthru
        _
      // Predicated region
      $region17: #{decoder_forward.7} parent=11 // pred_check
        %p340 = pneg %p126
      $region18: #{decoder_forward.7} parent=11 // pred_check_branch
        %342 = sbr.rel (%p340) target = $region20
      $region19: #{decoder_forward.7} parent=11 // pred_region
        _
      $region20: #{decoder_forward.7} parent=11 // pred_fallthru
        _
      // Predicated region
      $region21: #{decoder_forward.7} parent=11 // pred_check
        %p343 = pneg %p147
      $region22: #{decoder_forward.7} parent=11 // pred_check_branch
        %345 = sbr.rel (%p343) target = $region24
      $region23: #{decoder_forward.7} parent=11 // pred_region
        _
      $region24: #{decoder_forward.7} parent=11 // pred_fallthru
        _
      // Predicated region
      $region25: #{decoder_forward.7} parent=11 // pred_check
        %p346 = pneg %p168
      $region26: #{decoder_forward.7} parent=11 // pred_check_branch
        %348 = sbr.rel (%p346) target = $region28
      $region27: #{decoder_forward.7} parent=11 // pred_region
        _
      $region28: #{decoder_forward.7} parent=11 // pred_fallthru
        _
      // Predicated region
      $region29: #{decoder_forward.7} parent=11 // pred_check
        %p349 = pneg %p189
      $region30: #{decoder_forward.7} parent=11 // pred_check_branch
        %351 = sbr.rel (%p349) target = $region32
      $region31: #{decoder_forward.7} parent=11 // pred_region
        _
      $region32: #{decoder_forward.7} parent=11 // pred_fallthru
        _
      // Predicated region
      $region33: #{decoder_forward.7} parent=11 // pred_check
        %p352 = pneg %p210
      $region34: #{decoder_forward.7} parent=11 // pred_check_branch
        %354 = sbr.rel (%p352) target = $region36
      $region35: #{decoder_forward.7} parent=11 // pred_region
        _
      $region36: #{decoder_forward.7} parent=11 // pred_fallthru
        _
      // Predicated region
      $region37: #{decoder_forward.7} parent=11 // pred_check
        %p355 = pneg %p231
      $region38: #{decoder_forward.7} parent=11 // pred_check_branch
        %357 = sbr.rel (%p355) target = $region40
      $region39: #{decoder_forward.7} parent=11 // pred_region
        _
      $region40: #{decoder_forward.7} parent=11 // pred_fallthru
        _
      // Predicated region
      $region41: #{decoder_forward.7} parent=11 // pred_check
        %p358 = pneg %p252
      $region42: #{decoder_forward.7} parent=11 // pred_check_branch
        %360 = sbr.rel (%p358) target = $region44
      $region43: #{decoder_forward.7} parent=11 // pred_region
        _
      $region44: #{decoder_forward.7} parent=11 // pred_fallthru
        _
      // Predicated region
      $region45: #{decoder_forward.7} parent=11 // pred_check
        %p361 = pneg %p273
      $region46: #{decoder_forward.7} parent=11 // pred_check_branch
        %363 = sbr.rel (%p361) target = $region48
      $region47: #{decoder_forward.7} parent=11 // pred_region
        _
      $region48: #{decoder_forward.7} parent=11 // pred_fallthru
        _
      // Predicated region
      $region49: #{decoder_forward.7} parent=11 // pred_check
        %p364 = pneg %p294
      $region50: #{decoder_forward.7} parent=11 // pred_check_branch
        %366 = sbr.rel (%p364) target = $region52
      $region51: #{decoder_forward.7} parent=11 // pred_region
        _
      $region52: #{decoder_forward.7} parent=11 // pred_fallthru
        _
    $region12: #{decoder_forward.7} parent=5 // pred_fallthru
      _
    %p367 = scmp.lt.s32.totalorder %s18, 2
    // Predicated region
    $region53: #{decoder_forward.7} parent=5 // pred_check
      %p368 = pneg %p367
    $region54: #{decoder_forward.7} parent=5 // pred_check_branch
      %370 = sbr.rel (%p368) target = $region56
    $region55: #{decoder_forward.7} parent=5 // pred_region
      // Predicated region
      $region57: #{decoder_forward.7} parent=55 // pred_check
        %p371 = pneg %p52
      $region58: #{decoder_forward.7} parent=55 // pred_check_branch
        %373 = sbr.rel (%p371) target = $region60
      $region59: #{decoder_forward.7} parent=55 // pred_region
        %p374 = scmp.lt.s32.totalorder %s25, 1
        %s375 = scalar_select %p374, %s25, 1
        %p376 = scmp.lt.s32.totalorder %s26, 0
        %s377 = scalar_select %p376, %s26, 0
        %s378 = sadd.s32 %s377, %s375
        %s379 = smul.addr %s378, 8
        %s380 = scalar_lea.vmem %s0, %s379
      $region60: #{decoder_forward.7} parent=55 // pred_fallthru
        _
      // Predicated region
      $region61: #{decoder_forward.7} parent=55 // pred_check
        %p381 = pneg %p78
      $region62: #{decoder_forward.7} parent=55 // pred_check_branch
        %383 = sbr.rel (%p381) target = $region64
      $region63: #{decoder_forward.7} parent=55 // pred_region
        %p384 = scmp.lt.s32.totalorder %s25, 1
        %s385 = scalar_select %p384, %s25, 1
        %s386 = smul.addr %s385, 8
        %s387 = scalar_lea.vmem %s1, %s386
      $region64: #{decoder_forward.7} parent=55 // pred_fallthru
        _
    $region56: #{decoder_forward.7} parent=5 // pred_fallthru
      _
    %p388 = scmp.le.s32.totalorder 1, %s18
    %p389 = scmp.lt.s32.totalorder %s18, 3
    %p390 = pnand %p388, %p389
    %p391 = pneg %p390
    // Predicated region
    $region65: #{decoder_forward.7} parent=5 // pred_check
      _
    $region66: #{decoder_forward.7} parent=5 // pred_check_branch
      %393 = sbr.rel (%p390) target = $region68
    $region67: #{decoder_forward.7} parent=5 // pred_region
      %s394 = ssub.s32 %s18, 1
      %p395 = scmp.lt.s32.totalorder %s27, 1
      %s396 = scalar_select %p395, %s27, 1
      %p397 = scmp.lt.s32.totalorder %s28, 0
      %s398 = scalar_select %p397, %s28, 0
      %s399 = sadd.s32 %s398, %s396
      %s400 = smul.addr %s399, 8
      %s401 = scalar_lea.vmem %s0, %s400
      %p402 = pneg %p58
      %p403 = pneg %p55
      %p404 = scmp.lt.s32.totalorder %s27, 1
      %s405 = scalar_select %p404, %s27, 1
      %s406 = smul.addr %s405, 8
      %s407 = scalar_lea.vmem %s1, %s406
      %p408 = pneg %p84
      %p409 = pneg %p81
      %p410 = pneg %p105
      %p411 = pneg %p102
      %p412 = pneg %p126
      %p413 = pneg %p123
      %p414 = pneg %p147
      %p415 = pneg %p144
      %p416 = pneg %p168
      %p417 = pneg %p165
      %p418 = pneg %p189
      %p419 = pneg %p186
      %p420 = pneg %p210
      %p421 = pneg %p207
      %p422 = pneg %p231
      %p423 = pneg %p228
      %p424 = pneg %p252
      %p425 = pneg %p249
      %p426 = pneg %p273
      %p427 = pneg %p270
      %p428 = pneg %p294
      %p429 = pneg %p291
      %p430 = pneg %p322
      %p431 = pneg %p319
      %p432 = scmp.lt.s32.totalorder %s27, 1
      %s433 = scalar_select %p432, %s27, 1
      %p434 = scmp.lt.s32.totalorder %s28, 0
      %s435 = scalar_select %p434, %s28, 0
      %s436 = sadd.s32 %s435, %s433
      %s437 = smul.addr %s436, 8
      %s438 = scalar_lea.vmem %s12, %s437
      %p439 = scmp.lt.s32.totalorder %s27, 1
      %s440 = scalar_select %p439, %s27, 1
      %p441 = scmp.lt.s32.totalorder %s28, 0
      %s442 = scalar_select %p441, %s28, 0
      %s443 = sadd.s32 %s442, %s440
      %s444 = smul.addr %s443, 8
      %s445 = scalar_lea.vmem %s0, %s444
      %p446 = scmp.lt.s32.totalorder %s27, 1
      %s447 = scalar_select %p446, %s27, 1
      %s448 = smul.addr %s447, 8
      %s449 = scalar_lea.vmem %s1, %s448
      %p450 = scmp.lt.s32.totalorder %s27, 1
      %s451 = scalar_select %p450, %s27, 1
      %p452 = scmp.lt.s32.totalorder %s28, 0
      %s453 = scalar_select %p452, %s28, 0
      %s454 = sadd.s32 %s453, %s451
      %s455 = smul.addr %s454, 8
      %s456 = scalar_lea.vmem %s12, %s455
      %v458 = vld [vmem:[%s445] sm:$0xff]
      %v459 = vld [vmem:[%s449] sm:$0xff]
      %v460 = vpack.c.bf16 %v458, %v458
      %v461 = vpack.c.bf16 %v459, %v459
      %v462 = vld [vmem:[%s2] sm:$0xf]
      %v463 = vld [vmem:[%s3] sm:$0x1]
      %v465 = vlaneseq
      %v466 = vshrl.u32 %v465, 7
      %v467 = vsub.s32 0, %v466
      %v468 = vrot.slane %v463, %v467
      %vm470 = vcmask 64512
      %v472 = vsel %vm470, %v460, 0
      %vm474 = vcmask 1043456
      %v476 = vsel %vm474, %v462, 0
      %478 = vmatprep.subr.bf16.mxu0 0
      %479 = vmatpush1.bf16.msra.mxu0 %v476
      %480 = vmatprep.subr.bf16.mxu0 0
      %481 = vmatpush1.bf16.msra.mxu0 0
      %482 = vmatprep.subr.bf16.mxu0 0
      %483 = vmatpush1.bf16.msra.mxu0 0
      %484 = vmatprep.subr.bf16.mxu0 0
      %485 = vmatpush1.bf16.msra.mxu0 0
      %486 = vmatprep.subr.bf16.mxu0 0
      %487 = vmatpush1.bf16.msra.mxu0 0
      %488 = vmatprep.subr.bf16.mxu0 0
      %489 = vmatpush1.bf16.msra.mxu0 0
      %490 = vmatprep.subr.bf16.mxu0 0
      %491 = vmatpush1.bf16.msra.mxu0 0
      %492 = vmatprep.subr.bf16.mxu0 0
      %493 = vmatpush1.bf16.msra.mxu0 0
      %494 = vmatprep.subr.bf16.mxu0 0
      %495 = vmatpush1.bf16.msra.mxu0 0
      %496 = vmatprep.subr.bf16.mxu0 0
      %497 = vmatpush1.bf16.msra.mxu0 0
      %498 = vmatprep.subr.bf16.mxu0 0
      %499 = vmatpush1.bf16.msra.mxu0 0
      %500 = vmatprep.subr.bf16.mxu0 0
      %501 = vmatpush1.bf16.msra.mxu0 0
      %502 = vmatprep.subr.bf16.mxu0 0
      %503 = vmatpush1.bf16.msra.mxu0 0
      %504 = vmatprep.subr.bf16.mxu0 0
      %505 = vmatpush1.bf16.msra.mxu0 0
      %506 = vmatprep.subr.bf16.mxu0 0
      %507 = vmatpush1.bf16.msra.mxu0 0
      %508 = vmatprep.subr.bf16.mxu0 0
      %509 = vmatpush1.bf16.msra.mxu0 0
      %510 = vmatprep.mubr.bf16.mxu0 0
      %511 = vmatmul.mubr.bf16.gmra.mrb[0].mxu0 %v472
      %v512 = vpop.f32.mrb[0].mxu0
      %v513 = vadd.f32 %v468, %v512
      %v514 = vpop.f32.mrb[0].mxu0
      %v515 = vpop.f32.mrb[0].mxu0
      %v516 = vpop.f32.mrb[0].mxu0
      %517 = vdwg.mxu0
      %v518 = vld [vmem:[%s4] sm:$0xf]
      %v519 = vld [vmem:[%s5] sm:$0x1]
      %v521 = vlaneseq
      %v522 = vshrl.u32 %v521, 7
      %v523 = vsub.s32 0, %v522
      %v524 = vrot.slane %v519, %v523
      %v527 = vsel %vm470, %v461, 0
      %v530 = vsel %vm474, %v518, 0
      %532 = vmatprep.subr.bf16.mxu0 0
      %533 = vmatpush1.bf16.msra.mxu0 %v530
      %534 = vmatprep.subr.bf16.mxu0 0
      %535 = vmatpush1.bf16.msra.mxu0 0
      %536 = vmatprep.subr.bf16.mxu0 0
      %537 = vmatpush1.bf16.msra.mxu0 0
      %538 = vmatprep.subr.bf16.mxu0 0
      %539 = vmatpush1.bf16.msra.mxu0 0
      %540 = vmatprep.subr.bf16.mxu0 0
      %541 = vmatpush1.bf16.msra.mxu0 0
      %542 = vmatprep.subr.bf16.mxu0 0
      %543 = vmatpush1.bf16.msra.mxu0 0
      %544 = vmatprep.subr.bf16.mxu0 0
      %545 = vmatpush1.bf16.msra.mxu0 0
      %546 = vmatprep.subr.bf16.mxu0 0
      %547 = vmatpush1.bf16.msra.mxu0 0
      %548 = vmatprep.subr.bf16.mxu0 0
      %549 = vmatpush1.bf16.msra.mxu0 0
      %550 = vmatprep.subr.bf16.mxu0 0
      %551 = vmatpush1.bf16.msra.mxu0 0
      %552 = vmatprep.subr.bf16.mxu0 0
      %553 = vmatpush1.bf16.msra.mxu0 0
      %554 = vmatprep.subr.bf16.mxu0 0
      %555 = vmatpush1.bf16.msra.mxu0 0
      %556 = vmatprep.subr.bf16.mxu0 0
      %557 = vmatpush1.bf16.msra.mxu0 0
      %558 = vmatprep.subr.bf16.mxu0 0
      %559 = vmatpush1.bf16.msra.mxu0 0
      %560 = vmatprep.subr.bf16.mxu0 0
      %561 = vmatpush1.bf16.msra.mxu0 0
      %562 = vmatprep.subr.bf16.mxu0 0
      %563 = vmatpush1.bf16.msra.mxu0 0
      %564 = vmatprep.mubr.bf16.mxu0 0
      %565 = vmatmul.mubr.bf16.gmra.mrb[0].mxu0 %v527
      %v566 = vpop.f32.mrb[0].mxu0
      %v567 = vadd.f32 %v524, %v566
      %v568 = vpop.f32.mrb[0].mxu0
      %v569 = vpop.f32.mrb[0].mxu0
      %v570 = vpop.f32.mrb[0].mxu0
      %571 = vdwg.mxu0
      %v572 = vld [vmem:[%s6] sm:$0xf]
      %v573 = vld [vmem:[%s7] sm:$0x1]
      %v575 = vlaneseq
      %v576 = vshrl.u32 %v575, 7
      %v577 = vsub.s32 0, %v576
      %v578 = vrot.slane %v573, %v577
      %v581 = vsel %vm474, %v572, 0
      %583 = vmatprep.subr.bf16.mxu0 0
      %584 = vmatpush1.bf16.msra.mxu0 %v581
      %585 = vmatprep.subr.bf16.mxu0 0
      %586 = vmatpush1.bf16.msra.mxu0 0
      %587 = vmatprep.subr.bf16.mxu0 0
      %588 = vmatpush1.bf16.msra.mxu0 0
      %589 = vmatprep.subr.bf16.mxu0 0
      %590 = vmatpush1.bf16.msra.mxu0 0
      %591 = vmatprep.subr.bf16.mxu0 0
      %592 = vmatpush1.bf16.msra.mxu0 0
      %593 = vmatprep.subr.bf16.mxu0 0
      %594 = vmatpush1.bf16.msra.mxu0 0
      %595 = vmatprep.subr.bf16.mxu0 0
      %596 = vmatpush1.bf16.msra.mxu0 0
      %597 = vmatprep.subr.bf16.mxu0 0
      %598 = vmatpush1.bf16.msra.mxu0 0
      %599 = vmatprep.subr.bf16.mxu0 0
      %600 = vmatpush1.bf16.msra.mxu0 0
      %601 = vmatprep.subr.bf16.mxu0 0
      %602 = vmatpush1.bf16.msra.mxu0 0
      %603 = vmatprep.subr.bf16.mxu0 0
      %604 = vmatpush1.bf16.msra.mxu0 0
      %605 = vmatprep.subr.bf16.mxu0 0
      %606 = vmatpush1.bf16.msra.mxu0 0
      %607 = vmatprep.subr.bf16.mxu0 0
      %608 = vmatpush1.bf16.msra.mxu0 0
      %609 = vmatprep.subr.bf16.mxu0 0
      %610 = vmatpush1.bf16.msra.mxu0 0
      %611 = vmatprep.subr.bf16.mxu0 0
      %612 = vmatpush1.bf16.msra.mxu0 0
      %613 = vmatprep.subr.bf16.mxu0 0
      %614 = vmatpush1.bf16.msra.mxu0 0
      %615 = vmatprep.mubr.bf16.mxu0 0
      %616 = vmatmul.mubr.bf16.gmra.mrb[0].mxu0 %v527
      %v617 = vpop.f32.mrb[0].mxu0
      %v618 = vadd.f32 %v578, %v617
      %v619 = vpop.f32.mrb[0].mxu0
      %v620 = vpop.f32.mrb[0].mxu0
      %v621 = vpop.f32.mrb[0].mxu0
      %622 = vdwg.mxu0
      %v623 = vpack.c.bf16 %v513, %v513
      %v624 = vpack.c.bf16 %v567, %v567
      %v626 = vsel %vm470, %v623, 0
      %v629 = vsel %vm470, %v624, 0
      %631 = vmatprep.subr.bf16.mxu0 0
      %632 = vmatpush1.bf16.xpose.msra.mxu0 %v629
      %633 = vmatprep.subr.bf16.mxu0 0
      %634 = vmatpush1.bf16.xpose.msra.mxu0 0
      %635 = vmatprep.subr.bf16.mxu0 0
      %636 = vmatpush1.bf16.xpose.msra.mxu0 0
      %637 = vmatprep.subr.bf16.mxu0 0
      %638 = vmatpush1.bf16.xpose.msra.mxu0 0
      %639 = vmatprep.subr.bf16.mxu0 0
      %640 = vmatpush1.bf16.xpose.msra.mxu0 0
      %641 = vmatprep.subr.bf16.mxu0 0
      %642 = vmatpush1.bf16.xpose.msra.mxu0 0
      %643 = vmatprep.subr.bf16.mxu0 0
      %644 = vmatpush1.bf16.xpose.msra.mxu0 0
      %645 = vmatprep.subr.bf16.mxu0 0
      %646 = vmatpush1.bf16.xpose.msra.mxu0 0
      %647 = vmatprep.subr.bf16.mxu0 0
      %648 = vmatpush1.bf16.xpose.msra.mxu0 0
      %649 = vmatprep.subr.bf16.mxu0 0
      %650 = vmatpush1.bf16.xpose.msra.mxu0 0
      %651 = vmatprep.subr.bf16.mxu0 0
      %652 = vmatpush1.bf16.xpose.msra.mxu0 0
      %653 = vmatprep.subr.bf16.mxu0 0
      %654 = vmatpush1.bf16.xpose.msra.mxu0 0
      %655 = vmatprep.subr.bf16.mxu0 0
      %656 = vmatpush1.bf16.xpose.msra.mxu0 0
      %657 = vmatprep.subr.bf16.mxu0 0
      %658 = vmatpush1.bf16.xpose.msra.mxu0 0
      %659 = vmatprep.subr.bf16.mxu0 0
      %660 = vmatpush1.bf16.xpose.msra.mxu0 0
      %661 = vmatprep.subr.bf16.mxu0 0
      %662 = vmatpush1.bf16.xpose.msra.mxu0 0
      %663 = vmatprep.mubr.bf16.mxu0 0
      %664 = vmatmul.mubr.bf16.gmra.mrb[0].mxu0 %v626
      %v665 = vpop.f32.mrb[0].mxu0
      %v666 = vadd.f32 0.0, %v665
      %v667 = vpop.f32.mrb[0].mxu0
      %v668 = vpop.f32.mrb[0].mxu0
      %v669 = vpop.f32.mrb[0].mxu0
      %670 = vdwg.mxu0
      %v671 = vsel %vm470, %v666, -inf
      %672 = vmax.xlane.f32.xlu0 %v671
      %v673 = vpop.xlane.xlu0 %672
      %v674 = vsub.f32 %v666, %v673
      %v675 = vmul.f32 %v674, 1.442695
      %v676 = vpow.pop %v675
      %v677 = vsel %vm470, %v676, 0.0
      %678 = vadd.xlane.f32.xlu0 %v677
      %v679 = vpop.xlane.xlu0 %678
      %v680 = vrcp.pop %v679
      %v681 = vmul.f32 %v676, %v680
      %v682 = vpack.c.bf16 %v681, %v681
      %v683 = vpack.c.bf16 %v618, %v618
      %v685 = vsel %vm470, %v682, 0
      %v688 = vsel %vm474, %v683, 0
      %690 = vmatprep.subr.bf16.mxu0 0
      %691 = vmatpush1.bf16.msra.mxu0 %v688
      %692 = vmatprep.subr.bf16.mxu0 0
      %693 = vmatpush1.bf16.msra.mxu0 0
      %694 = vmatprep.subr.bf16.mxu0 0
      %695 = vmatpush1.bf16.msra.mxu0 0
      %696 = vmatprep.subr.bf16.mxu0 0
      %697 = vmatpush1.bf16.msra.mxu0 0
      %698 = vmatprep.subr.bf16.mxu0 0
      %699 = vmatpush1.bf16.msra.mxu0 0
      %700 = vmatprep.subr.bf16.mxu0 0
      %701 = vmatpush1.bf16.msra.mxu0 0
      %702 = vmatprep.subr.bf16.mxu0 0
      %703 = vmatpush1.bf16.msra.mxu0 0
      %704 = vmatprep.subr.bf16.mxu0 0
      %705 = vmatpush1.bf16.msra.mxu0 0
      %706 = vmatprep.subr.bf16.mxu0 0
      %707 = vmatpush1.bf16.msra.mxu0 0
      %708 = vmatprep.subr.bf16.mxu0 0
      %709 = vmatpush1.bf16.msra.mxu0 0
      %710 = vmatprep.subr.bf16.mxu0 0
      %711 = vmatpush1.bf16.msra.mxu0 0
      %712 = vmatprep.subr.bf16.mxu0 0
      %713 = vmatpush1.bf16.msra.mxu0 0
      %714 = vmatprep.subr.bf16.mxu0 0
      %715 = vmatpush1.bf16.msra.mxu0 0
      %716 = vmatprep.subr.bf16.mxu0 0
      %717 = vmatpush1.bf16.msra.mxu0 0
      %718 = vmatprep.subr.bf16.mxu0 0
      %719 = vmatpush1.bf16.msra.mxu0 0
      %720 = vmatprep.subr.bf16.mxu0 0
      %721 = vmatpush1.bf16.msra.mxu0 0
      %722 = vmatprep.mubr.bf16.mxu0 0
      %723 = vmatmul.mubr.bf16.gmra.mrb[0].mxu0 %v685
      %v724 = vpop.f32.mrb[0].mxu0
      %v725 = vadd.f32 0.0, %v724
      %v726 = vpop.f32.mrb[0].mxu0
      %v727 = vpop.f32.mrb[0].mxu0
      %v728 = vpop.f32.mrb[0].mxu0
      %729 = vdwg.mxu0
      %v730 = vpack.c.bf16 %v725, %v725
      %v731 = vld [vmem:[%s8] sm:$0xf]
      %733 = vrot.lane.b32.xlu0 %v460, 120
      %v734 = vpop.permute.xlu0 %733
      %v736 = vsel %vm470, %v734, 0
      %738 = vmatprep.subr.bf16.mxu0 0
      %739 = vmatpush1.bf16.msra.mxu0 %v476
      %740 = vmatprep.subr.bf16.mxu0 0
      %741 = vmatpush1.bf16.msra.mxu0 0
      %742 = vmatprep.subr.bf16.mxu0 0
      %743 = vmatpush1.bf16.msra.mxu0 0
      %744 = vmatprep.subr.bf16.mxu0 0
      %745 = vmatpush1.bf16.msra.mxu0 0
      %746 = vmatprep.subr.bf16.mxu0 0
      %747 = vmatpush1.bf16.msra.mxu0 0
      %748 = vmatprep.subr.bf16.mxu0 0
      %749 = vmatpush1.bf16.msra.mxu0 0
      %750 = vmatprep.subr.bf16.mxu0 0
      %751 = vmatpush1.bf16.msra.mxu0 0
      %752 = vmatprep.subr.bf16.mxu0 0
      %753 = vmatpush1.bf16.msra.mxu0 0
      %754 = vmatprep.subr.bf16.mxu0 0
      %755 = vmatpush1.bf16.msra.mxu0 0
      %756 = vmatprep.subr.bf16.mxu0 0
      %757 = vmatpush1.bf16.msra.mxu0 0
      %758 = vmatprep.subr.bf16.mxu0 0
      %759 = vmatpush1.bf16.msra.mxu0 0
      %760 = vmatprep.subr.bf16.mxu0 0
      %761 = vmatpush1.bf16.msra.mxu0 0
      %762 = vmatprep.subr.bf16.mxu0 0
      %763 = vmatpush1.bf16.msra.mxu0 0
      %764 = vmatprep.subr.bf16.mxu0 0
      %765 = vmatpush1.bf16.msra.mxu0 0
      %766 = vmatprep.subr.bf16.mxu0 0
      %767 = vmatpush1.bf16.msra.mxu0 0
      %768 = vmatprep.subr.bf16.mxu0 0
      %769 = vmatpush1.bf16.msra.mxu0 0
      %770 = vmatprep.mubr.bf16.mxu0 0
      %771 = vmatmul.mubr.bf16.gmra.mrb[0].mxu0 %v736
      %v772 = vpop.f32.mrb[0].mxu0
      %v773 = vadd.f32 %v468, %v772
      %v774 = vpop.f32.mrb[0].mxu0
      %v775 = vpop.f32.mrb[0].mxu0
      %v776 = vpop.f32.mrb[0].mxu0
      %777 = vdwg.mxu0
      %779 = vrot.lane.b32.xlu0 %v461, 120
      %v780 = vpop.permute.xlu0 %779
      %v782 = vsel %vm470, %v780, 0
      %784 = vmatprep.subr.bf16.mxu0 0
      %785 = vmatpush1.bf16.msra.mxu0 %v530
      %786 = vmatprep.subr.bf16.mxu0 0
      %787 = vmatpush1.bf16.msra.mxu0 0
      %788 = vmatprep.subr.bf16.mxu0 0
      %789 = vmatpush1.bf16.msra.mxu0 0
      %790 = vmatprep.subr.bf16.mxu0 0
      %791 = vmatpush1.bf16.msra.mxu0 0
      %792 = vmatprep.subr.bf16.mxu0 0
      %793 = vmatpush1.bf16.msra.mxu0 0
      %794 = vmatprep.subr.bf16.mxu0 0
      %795 = vmatpush1.bf16.msra.mxu0 0
      %796 = vmatprep.subr.bf16.mxu0 0
      %797 = vmatpush1.bf16.msra.mxu0 0
      %798 = vmatprep.subr.bf16.mxu0 0
      %799 = vmatpush1.bf16.msra.mxu0 0
      %800 = vmatprep.subr.bf16.mxu0 0
      %801 = vmatpush1.bf16.msra.mxu0 0
      %802 = vmatprep.subr.bf16.mxu0 0
      %803 = vmatpush1.bf16.msra.mxu0 0
      %804 = vmatprep.subr.bf16.mxu0 0
      %805 = vmatpush1.bf16.msra.mxu0 0
      %806 = vmatprep.subr.bf16.mxu0 0
      %807 = vmatpush1.bf16.msra.mxu0 0
      %808 = vmatprep.subr.bf16.mxu0 0
      %809 = vmatpush1.bf16.msra.mxu0 0
      %810 = vmatprep.subr.bf16.mxu0 0
      %811 = vmatpush1.bf16.msra.mxu0 0
      %812 = vmatprep.subr.bf16.mxu0 0
      %813 = vmatpush1.bf16.msra.mxu0 0
      %814 = vmatprep.subr.bf16.mxu0 0
      %815 = vmatpush1.bf16.msra.mxu0 0
      %816 = vmatprep.mubr.bf16.mxu0 0
      %817 = vmatmul.mubr.bf16.gmra.mrb[0].mxu0 %v782
      %v818 = vpop.f32.mrb[0].mxu0
      %v819 = vadd.f32 %v524, %v818
      %v820 = vpop.f32.mrb[0].mxu0
      %v821 = vpop.f32.mrb[0].mxu0
      %v822 = vpop.f32.mrb[0].mxu0
      %823 = vdwg.mxu0
      %824 = vmatprep.subr.bf16.mxu0 0
      %825 = vmatpush1.bf16.msra.mxu0 %v581
      %826 = vmatprep.subr.bf16.mxu0 0
      %827 = vmatpush1.bf16.msra.mxu0 0
      %828 = vmatprep.subr.bf16.mxu0 0
      %829 = vmatpush1.bf16.msra.mxu0 0
      %830 = vmatprep.subr.bf16.mxu0 0
      %831 = vmatpush1.bf16.msra.mxu0 0
      %832 = vmatprep.subr.bf16.mxu0 0
      %833 = vmatpush1.bf16.msra.mxu0 0
      %834 = vmatprep.subr.bf16.mxu0 0
      %835 = vmatpush1.bf16.msra.mxu0 0
      %836 = vmatprep.subr.bf16.mxu0 0
      %837 = vmatpush1.bf16.msra.mxu0 0
      %838 = vmatprep.subr.bf16.mxu0 0
      %839 = vmatpush1.bf16.msra.mxu0 0
      %840 = vmatprep.subr.bf16.mxu0 0
      %841 = vmatpush1.bf16.msra.mxu0 0
      %842 = vmatprep.subr.bf16.mxu0 0
      %843 = vmatpush1.bf16.msra.mxu0 0
      %844 = vmatprep.subr.bf16.mxu0 0
      %845 = vmatpush1.bf16.msra.mxu0 0
      %846 = vmatprep.subr.bf16.mxu0 0
      %847 = vmatpush1.bf16.msra.mxu0 0
      %848 = vmatprep.subr.bf16.mxu0 0
      %849 = vmatpush1.bf16.msra.mxu0 0
      %850 = vmatprep.subr.bf16.mxu0 0
      %851 = vmatpush1.bf16.msra.mxu0 0
      %852 = vmatprep.subr.bf16.mxu0 0
      %853 = vmatpush1.bf16.msra.mxu0 0
      %854 = vmatprep.subr.bf16.mxu0 0
      %855 = vmatpush1.bf16.msra.mxu0 0
      %856 = vmatprep.mubr.bf16.mxu0 0
      %857 = vmatmul.mubr.bf16.gmra.mrb[0].mxu0 %v782
      %v858 = vpop.f32.mrb[0].mxu0
      %v859 = vadd.f32 %v578, %v858
      %v860 = vpop.f32.mrb[0].mxu0
      %v861 = vpop.f32.mrb[0].mxu0
      %v862 = vpop.f32.mrb[0].mxu0
      %863 = vdwg.mxu0
      %v864 = vpack.c.bf16 %v773, %v773
      %v865 = vpack.c.bf16 %v819, %v819
      %v867 = vsel %vm470, %v864, 0
      %v870 = vsel %vm470, %v865, 0
      %872 = vmatprep.subr.bf16.mxu0 0
      %873 = vmatpush1.bf16.xpose.msra.mxu0 %v870
      %874 = vmatprep.subr.bf16.mxu0 0
      %875 = vmatpush1.bf16.xpose.msra.mxu0 0
      %876 = vmatprep.subr.bf16.mxu0 0
      %877 = vmatpush1.bf16.xpose.msra.mxu0 0
      %878 = vmatprep.subr.bf16.mxu0 0
      %879 = vmatpush1.bf16.xpose.msra.mxu0 0
      %880 = vmatprep.subr.bf16.mxu0 0
      %881 = vmatpush1.bf16.xpose.msra.mxu0 0
      %882 = vmatprep.subr.bf16.mxu0 0
      %883 = vmatpush1.bf16.xpose.msra.mxu0 0
      %884 = vmatprep.subr.bf16.mxu0 0
      %885 = vmatpush1.bf16.xpose.msra.mxu0 0
      %886 = vmatprep.subr.bf16.mxu0 0
      %887 = vmatpush1.bf16.xpose.msra.mxu0 0
      %888 = vmatprep.subr.bf16.mxu0 0
      %889 = vmatpush1.bf16.xpose.msra.mxu0 0
      %890 = vmatprep.subr.bf16.mxu0 0
      %891 = vmatpush1.bf16.xpose.msra.mxu0 0
      %892 = vmatprep.subr.bf16.mxu0 0
      %893 = vmatpush1.bf16.xpose.msra.mxu0 0
      %894 = vmatprep.subr.bf16.mxu0 0
      %895 = vmatpush1.bf16.xpose.msra.mxu0 0
      %896 = vmatprep.subr.bf16.mxu0 0
      %897 = vmatpush1.bf16.xpose.msra.mxu0 0
      %898 = vmatprep.subr.bf16.mxu0 0
      %899 = vmatpush1.bf16.xpose.msra.mxu0 0
      %900 = vmatprep.subr.bf16.mxu0 0
      %901 = vmatpush1.bf16.xpose.msra.mxu0 0
      %902 = vmatprep.subr.bf16.mxu0 0
      %903 = vmatpush1.bf16.xpose.msra.mxu0 0
      %904 = vmatprep.mubr.bf16.mxu0 0
      %905 = vmatmul.mubr.bf16.gmra.mrb[0].mxu0 %v867
      %v906 = vpop.f32.mrb[0].mxu0
      %v907 = vadd.f32 0.0, %v906
      %v908 = vpop.f32.mrb[0].mxu0
      %v909 = vpop.f32.mrb[0].mxu0
      %v910 = vpop.f32.mrb[0].mxu0
      %911 = vdwg.mxu0
      %v912 = vsel %vm470, %v907, -inf
      %913 = vmax.xlane.f32.xlu0 %v912
      %v914 = vpop.xlane.xlu0 %913
      %v915 = vsub.f32 %v907, %v914
      %v916 = vmul.f32 %v915, 1.442695
      %v917 = vpow.pop %v916
      %v918 = vsel %vm470, %v917, 0.0
      %919 = vadd.xlane.f32.xlu0 %v918
      %v920 = vpop.xlane.xlu0 %919
      %v921 = vrcp.pop %v920
      %v922 = vmul.f32 %v917, %v921
      %v923 = vpack.c.bf16 %v922, %v922
      %v924 = vpack.c.bf16 %v859, %v859
      %v926 = vsel %vm470, %v923, 0
      %v929 = vsel %vm474, %v924, 0
      %931 = vmatprep.subr.bf16.mxu0 0
      %932 = vmatpush1.bf16.msra.mxu0 %v929
      %933 = vmatprep.subr.bf16.mxu0 0
      %934 = vmatpush1.bf16.msra.mxu0 0
      %935 = vmatprep.subr.bf16.mxu0 0
      %936 = vmatpush1.bf16.msra.mxu0 0
      %937 = vmatprep.subr.bf16.mxu0 0
      %938 = vmatpush1.bf16.msra.mxu0 0
      %939 = vmatprep.subr.bf16.mxu0 0
      %940 = vmatpush1.bf16.msra.mxu0 0
      %941 = vmatprep.subr.bf16.mxu0 0
      %942 = vmatpush1.bf16.msra.mxu0 0
      %943 = vmatprep.subr.bf16.mxu0 0
      %944 = vmatpush1.bf16.msra.mxu0 0
      %945 = vmatprep.subr.bf16.mxu0 0
      %946 = vmatpush1.bf16.msra.mxu0 0
      %947 = vmatprep.subr.bf16.mxu0 0
      %948 = vmatpush1.bf16.msra.mxu0 0
      %949 = vmatprep.subr.bf16.mxu0 0
      %950 = vmatpush1.bf16.msra.mxu0 0
      %951 = vmatprep.subr.bf16.mxu0 0
      %952 = vmatpush1.bf16.msra.mxu0 0
      %953 = vmatprep.subr.bf16.mxu0 0
      %954 = vmatpush1.bf16.msra.mxu0 0
      %955 = vmatprep.subr.bf16.mxu0 0
      %956 = vmatpush1.bf16.msra.mxu0 0
      %957 = vmatprep.subr.bf16.mxu0 0
      %958 = vmatpush1.bf16.msra.mxu0 0
      %959 = vmatprep.subr.bf16.mxu0 0
      %960 = vmatpush1.bf16.msra.mxu0 0
      %961 = vmatprep.subr.bf16.mxu0 0
      %962 = vmatpush1.bf16.msra.mxu0 0
      %963 = vmatprep.mubr.bf16.mxu0 0
      %964 = vmatmul.mubr.bf16.gmra.mrb[0].mxu0 %v926
      %v965 = vpop.f32.mrb[0].mxu0
      %v966 = vadd.f32 0.0, %v965
      %v967 = vpop.f32.mrb[0].mxu0
      %v968 = vpop.f32.mrb[0].mxu0
      %v969 = vpop.f32.mrb[0].mxu0
      %970 = vdwg.mxu0
      %v971 = vpack.c.bf16 %v966, %v966
      %s972 = scalar_lea.vmem %s8, 4
      %v973 = vld [vmem:[%s972] sm:$0xf]
      %v975 = vsel %vm470, %v971, 0
      %v978 = vsel %vm474, %v973, 0
      %980 = vmatprep.subr.bf16.mxu0 0
      %981 = vmatpush1.bf16.msra.mxu0 %v978
      %982 = vmatprep.subr.bf16.mxu0 0
      %983 = vmatpush1.bf16.msra.mxu0 0
      %984 = vmatprep.subr.bf16.mxu0 0
      %985 = vmatpush1.bf16.msra.mxu0 0
      %986 = vmatprep.subr.bf16.mxu0 0
      %987 = vmatpush1.bf16.msra.mxu0 0
      %988 = vmatprep.subr.bf16.mxu0 0
      %989 = vmatpush1.bf16.msra.mxu0 0
      %990 = vmatprep.subr.bf16.mxu0 0
      %991 = vmatpush1.bf16.msra.mxu0 0
      %992 = vmatprep.subr.bf16.mxu0 0
      %993 = vmatpush1.bf16.msra.mxu0 0
      %994 = vmatprep.subr.bf16.mxu0 0
      %995 = vmatpush1.bf16.msra.mxu0 0
      %996 = vmatprep.subr.bf16.mxu0 0
      %997 = vmatpush1.bf16.msra.mxu0 0
      %998 = vmatprep.subr.bf16.mxu0 0
      %999 = vmatpush1.bf16.msra.mxu0 0
      %1000 = vmatprep.subr.bf16.mxu0 0
      %1001 = vmatpush1.bf16.msra.mxu0 0
      %1002 = vmatprep.subr.bf16.mxu0 0
      %1003 = vmatpush1.bf16.msra.mxu0 0
      %1004 = vmatprep.subr.bf16.mxu0 0
      %1005 = vmatpush1.bf16.msra.mxu0 0
      %1006 = vmatprep.subr.bf16.mxu0 0
      %1007 = vmatpush1.bf16.msra.mxu0 0
      %1008 = vmatprep.subr.bf16.mxu0 0
      %1009 = vmatpush1.bf16.msra.mxu0 0
      %1010 = vmatprep.subr.bf16.mxu0 0
      %1011 = vmatpush1.bf16.msra.mxu0 0
      %1012 = vmatprep.mubr.bf16.mxu0 0
      %1013 = vmatmul.mubr.bf16.gmra.mrb[0].mxu0 %v975
      %v1014 = vpop.f32.mrb[0].mxu0
      %v1015 = vadd.f32 0.0, %v1014
      %v1016 = vpop.f32.mrb[0].mxu0
      %v1017 = vpop.f32.mrb[0].mxu0
      %v1018 = vpop.f32.mrb[0].mxu0
      %1019 = vdwg.mxu0
      %v1021 = vsel %vm470, %v730, 0
      %v1024 = vsel %vm474, %v731, 0
      %1026 = vmatprep.subr.bf16.mxu0 0
      %1027 = vmatpush1.bf16.msra.mxu0 %v1024
      %1028 = vmatprep.subr.bf16.mxu0 0
      %1029 = vmatpush1.bf16.msra.mxu0 0
      %1030 = vmatprep.subr.bf16.mxu0 0
      %1031 = vmatpush1.bf16.msra.mxu0 0
      %1032 = vmatprep.subr.bf16.mxu0 0
      %1033 = vmatpush1.bf16.msra.mxu0 0
      %1034 = vmatprep.subr.bf16.mxu0 0
      %1035 = vmatpush1.bf16.msra.mxu0 0
      %1036 = vmatprep.subr.bf16.mxu0 0
      %1037 = vmatpush1.bf16.msra.mxu0 0
      %1038 = vmatprep.subr.bf16.mxu0 0
      %1039 = vmatpush1.bf16.msra.mxu0 0
      %1040 = vmatprep.subr.bf16.mxu0 0
      %1041 = vmatpush1.bf16.msra.mxu0 0
      %1042 = vmatprep.subr.bf16.mxu0 0
      %1043 = vmatpush1.bf16.msra.mxu0 0
      %1044 = vmatprep.subr.bf16.mxu0 0
      %1045 = vmatpush1.bf16.msra.mxu0 0
      %1046 = vmatprep.subr.bf16.mxu0 0
      %1047 = vmatpush1.bf16.msra.mxu0 0
      %1048 = vmatprep.subr.bf16.mxu0 0
      %1049 = vmatpush1.bf16.msra.mxu0 0
      %1050 = vmatprep.subr.bf16.mxu0 0
      %1051 = vmatpush1.bf16.msra.mxu0 0
      %1052 = vmatprep.subr.bf16.mxu0 0
      %1053 = vmatpush1.bf16.msra.mxu0 0
      %1054 = vmatprep.subr.bf16.mxu0 0
      %1055 = vmatpush1.bf16.msra.mxu0 0
      %1056 = vmatprep.subr.bf16.mxu0 0
      %1057 = vmatpush1.bf16.msra.mxu0 0
      %1058 = vmatprep.mubr.bf16.mxu0 0
      %1059 = vmatmul.mubr.bf16.gmra.mrb[0].mxu0 %v1021
      %v1060 = vpop.f32.mrb[0].mxu0
      %v1061 = vadd.f32 %v1015, %v1060
      %v1062 = vpop.f32.mrb[0].mxu0
      %v1063 = vpop.f32.mrb[0].mxu0
      %v1064 = vpop.f32.mrb[0].mxu0
      %1065 = vdwg.mxu0
      %1066 = vrot.lane.b32.xlu0 %v460, 112
      %v1067 = vpop.permute.xlu0 %1066
      %v1069 = vsel %vm470, %v1067, 0
      %1071 = vmatprep.subr.bf16.mxu0 0
      %1072 = vmatpush1.bf16.msra.mxu0 %v476
      %1073 = vmatprep.subr.bf16.mxu0 0
      %1074 = vmatpush1.bf16.msra.mxu0 0
      %1075 = vmatprep.subr.bf16.mxu0 0
      %1076 = vmatpush1.bf16.msra.mxu0 0
      %1077 = vmatprep.subr.bf16.mxu0 0
      %1078 = vmatpush1.bf16.msra.mxu0 0
      %1079 = vmatprep.subr.bf16.mxu0 0
      %1080 = vmatpush1.bf16.msra.mxu0 0
      %1081 = vmatprep.subr.bf16.mxu0 0
      %1082 = vmatpush1.bf16.msra.mxu0 0
      %1083 = vmatprep.subr.bf16.mxu0 0
      %1084 = vmatpush1.bf16.msra.mxu0 0
      %1085 = vmatprep.subr.bf16.mxu0 0
      %1086 = vmatpush1.bf16.msra.mxu0 0
      %1087 = vmatprep.subr.bf16.mxu0 0
      %1088 = vmatpush1.bf16.msra.mxu0 0
      %1089 = vmatprep.subr.bf16.mxu0 0
      %1090 = vmatpush1.bf16.msra.mxu0 0
      %1091 = vmatprep.subr.bf16.mxu0 0
      %1092 = vmatpush1.bf16.msra.mxu0 0
      %1093 = vmatprep.subr.bf16.mxu0 0
      %1094 = vmatpush1.bf16.msra.mxu0 0
      %1095 = vmatprep.subr.bf16.mxu0 0
      %1096 = vmatpush1.bf16.msra.mxu0 0
      %1097 = vmatprep.subr.bf16.mxu0 0
      %1098 = vmatpush1.bf16.msra.mxu0 0
      %1099 = vmatprep.subr.bf16.mxu0 0
      %1100 = vmatpush1.bf16.msra.mxu0 0
      %1101 = vmatprep.subr.bf16.mxu0 0
      %1102 = vmatpush1.bf16.msra.mxu0 0
      %1103 = vmatprep.mubr.bf16.mxu0 0
      %1104 = vmatmul.mubr.bf16.gmra.mrb[0].mxu0 %v1069
      %v1105 = vpop.f32.mrb[0].mxu0
      %v1106 = vadd.f32 %v468, %v1105
      %v1107 = vpop.f32.mrb[0].mxu0
      %v1108 = vpop.f32.mrb[0].mxu0
      %v1109 = vpop.f32.mrb[0].mxu0
      %1110 = vdwg.mxu0
      %1111 = vrot.lane.b32.xlu0 %v461, 112
      %v1112 = vpop.permute.xlu0 %1111
      %v1114 = vsel %vm470, %v1112, 0
      %1116 = vmatprep.subr.bf16.mxu0 0
      %1117 = vmatpush1.bf16.msra.mxu0 %v530
      %1118 = vmatprep.subr.bf16.mxu0 0
      %1119 = vmatpush1.bf16.msra.mxu0 0
      %1120 = vmatprep.subr.bf16.mxu0 0
      %1121 = vmatpush1.bf16.msra.mxu0 0
      %1122 = vmatprep.subr.bf16.mxu0 0
      %1123 = vmatpush1.bf16.msra.mxu0 0
      %1124 = vmatprep.subr.bf16.mxu0 0
      %1125 = vmatpush1.bf16.msra.mxu0 0
      %1126 = vmatprep.subr.bf16.mxu0 0
      %1127 = vmatpush1.bf16.msra.mxu0 0
      %1128 = vmatprep.subr.bf16.mxu0 0
      %1129 = vmatpush1.bf16.msra.mxu0 0
      %1130 = vmatprep.subr.bf16.mxu0 0
      %1131 = vmatpush1.bf16.msra.mxu0 0
      %1132 = vmatprep.subr.bf16.mxu0 0
      %1133 = vmatpush1.bf16.msra.mxu0 0
      %1134 = vmatprep.subr.bf16.mxu0 0
      %1135 = vmatpush1.bf16.msra.mxu0 0
      %1136 = vmatprep.subr.bf16.mxu0 0
      %1137 = vmatpush1.bf16.msra.mxu0 0
      %1138 = vmatprep.subr.bf16.mxu0 0
      %1139 = vmatpush1.bf16.msra.mxu0 0
      %1140 = vmatprep.subr.bf16.mxu0 0
      %1141 = vmatpush1.bf16.msra.mxu0 0
      %1142 = vmatprep.subr.bf16.mxu0 0
      %1143 = vmatpush1.bf16.msra.mxu0 0
      %1144 = vmatprep.subr.bf16.mxu0 0
      %1145 = vmatpush1.bf16.msra.mxu0 0
      %1146 = vmatprep.subr.bf16.mxu0 0
      %1147 = vmatpush1.bf16.msra.mxu0 0
      %1148 = vmatprep.mubr.bf16.mxu0 0
      %1149 = vmatmul.mubr.bf16.gmra.mrb[0].mxu0 %v1114
      %v1150 = vpop.f32.mrb[0].mxu0
      %v1151 = vadd.f32 %v524, %v1150
      %v1152 = vpop.f32.mrb[0].mxu0
      %v1153 = vpop.f32.mrb[0].mxu0
      %v1154 = vpop.f32.mrb[0].mxu0
      %1155 = vdwg.mxu0
      %1156 = vmatprep.subr.bf16.mxu0 0
      %1157 = vmatpush1.bf16.msra.mxu0 %v581
      %1158 = vmatprep.subr.bf16.mxu0 0
      %1159 = vmatpush1.bf16.msra.mxu0 0
      %1160 = vmatprep.subr.bf16.mxu0 0
      %1161 = vmatpush1.bf16.msra.mxu0 0
      %1162 = vmatprep.subr.bf16.mxu0 0
      %1163 = vmatpush1.bf16.msra.mxu0 0
      %1164 = vmatprep.subr.bf16.mxu0 0
      %1165 = vmatpush1.bf16.msra.mxu0 0
      %1166 = vmatprep.subr.bf16.mxu0 0
      %1167 = vmatpush1.bf16.msra.mxu0 0
      %1168 = vmatprep.subr.bf16.mxu0 0
      %1169 = vmatpush1.bf16.msra.mxu0 0
      %1170 = vmatprep.subr.bf16.mxu0 0
      %1171 = vmatpush1.bf16.msra.mxu0 0
      %1172 = vmatprep.subr.bf16.mxu0 0
      %1173 = vmatpush1.bf16.msra.mxu0 0
      %1174 = vmatprep.subr.bf16.mxu0 0
      %1175 = vmatpush1.bf16.msra.mxu0 0
      %1176 = vmatprep.subr.bf16.mxu0 0
      %1177 = vmatpush1.bf16.msra.mxu0 0
      %1178 = vmatprep.subr.bf16.mxu0 0
      %1179 = vmatpush1.bf16.msra.mxu0 0
      %1180 = vmatprep.subr.bf16.mxu0 0
      %1181 = vmatpush1.bf16.msra.mxu0 0
      %1182 = vmatprep.subr.bf16.mxu0 0
      %1183 = vmatpush1.bf16.msra.mxu0 0
      %1184 = vmatprep.subr.bf16.mxu0 0
      %1185 = vmatpush1.bf16.msra.mxu0 0
      %1186 = vmatprep.subr.bf16.mxu0 0
      %1187 = vmatpush1.bf16.msra.mxu0 0
      %1188 = vmatprep.mubr.bf16.mxu0 0
      %1189 = vmatmul.mubr.bf16.gmra.mrb[0].mxu0 %v1114
      %v1190 = vpop.f32.mrb[0].mxu0
      %v1191 = vadd.f32 %v578, %v1190
      %v1192 = vpop.f32.mrb[0].mxu0
      %v1193 = vpop.f32.mrb[0].mxu0
      %v1194 = vpop.f32.mrb[0].mxu0
      %1195 = vdwg.mxu0
      %v1196 = vpack.c.bf16 %v1106, %v1106
      %v1197 = vpack.c.bf16 %v1151, %v1151
      %v1199 = vsel %vm470, %v1196, 0
      %v1202 = vsel %vm470, %v1197, 0
      %1204 = vmatprep.subr.bf16.mxu0 0
      %1205 = vmatpush1.bf16.xpose.msra.mxu0 %v1202
      %1206 = vmatprep.subr.bf16.mxu0 0
      %1207 = vmatpush1.bf16.xpose.msra.mxu0 0
      %1208 = vmatprep.subr.bf16.mxu0 0
      %1209 = vmatpush1.bf16.xpose.msra.mxu0 0
      %1210 = vmatprep.subr.bf16.mxu0 0
      %1211 = vmatpush1.bf16.xpose.msra.mxu0 0
      %1212 = vmatprep.subr.bf16.mxu0 0
      %1213 = vmatpush1.bf16.xpose.msra.mxu0 0
      %1214 = vmatprep.subr.bf16.mxu0 0
      %1215 = vmatpush1.bf16.xpose.msra.mxu0 0
      %1216 = vmatprep.subr.bf16.mxu0 0
      %1217 = vmatpush1.bf16.xpose.msra.mxu0 0
      %1218 = vmatprep.subr.bf16.mxu0 0
      %1219 = vmatpush1.bf16.xpose.msra.mxu0 0
      %1220 = vmatprep.subr.bf16.mxu0 0
      %1221 = vmatpush1.bf16.xpose.msra.mxu0 0
      %1222 = vmatprep.subr.bf16.mxu0 0
      %1223 = vmatpush1.bf16.xpose.msra.mxu0 0
      %1224 = vmatprep.subr.bf16.mxu0 0
      %1225 = vmatpush1.bf16.xpose.msra.mxu0 0
      %1226 = vmatprep.subr.bf16.mxu0 0
      %1227 = vmatpush1.bf16.xpose.msra.mxu0 0
      %1228 = vmatprep.subr.bf16.mxu0 0
      %1229 = vmatpush1.bf16.xpose.msra.mxu0 0
      %1230 = vmatprep.subr.bf16.mxu0 0
      %1231 = vmatpush1.bf16.xpose.msra.mxu0 0
      %1232 = vmatprep.subr.bf16.mxu0 0
      %1233 = vmatpush1.bf16.xpose.msra.mxu0 0
      %1234 = vmatprep.subr.bf16.mxu0 0
      %1235 = vmatpush1.bf16.xpose.msra.mxu0 0
      %1236 = vmatprep.mubr.bf16.mxu0 0
      %1237 = vmatmul.mubr.bf16.gmra.mrb[0].mxu0 %v1199
      %v1238 = vpop.f32.mrb[0].mxu0
      %v1239 = vadd.f32 0.0, %v1238
      %v1240 = vpop.f32.mrb[0].mxu0
      %v1241 = vpop.f32.mrb[0].mxu0
      %v1242 = vpop.f32.mrb[0].mxu0
      %1243 = vdwg.mxu0
      %v1244 = vsel %vm470, %v1239, -inf
      %1245 = vmax.xlane.f32.xlu0 %v1244
      %v1246 = vpop.xlane.xlu0 %1245
      %v1247 = vsub.f32 %v1239, %v1246
      %v1248 = vmul.f32 %v1247, 1.442695
      %v1249 = vpow.pop %v1248
      %v1250 = vsel %vm470, %v1249, 0.0
      %1251 = vadd.xlane.f32.xlu0 %v1250
      %v1252 = vpop.xlane.xlu0 %1251
      %v1253 = vrcp.pop %v1252
      %v1254 = vmul.f32 %v1249, %v1253
      %v1255 = vpack.c.bf16 %v1254, %v1254
      %v1256 = vpack.c.bf16 %v1191, %v1191
      %v1258 = vsel %vm470, %v1255, 0
      %v1261 = vsel %vm474, %v1256, 0
      %1263 = vmatprep.subr.bf16.mxu0 0
      %1264 = vmatpush1.bf16.msra.mxu0 %v1261
      %1265 = vmatprep.subr.bf16.mxu0 0
      %1266 = vmatpush1.bf16.msra.mxu0 0
      %1267 = vmatprep.subr.bf16.mxu0 0
      %1268 = vmatpush1.bf16.msra.mxu0 0
      %1269 = vmatprep.subr.bf16.mxu0 0
      %1270 = vmatpush1.bf16.msra.mxu0 0
      %1271 = vmatprep.subr.bf16.mxu0 0
      %1272 = vmatpush1.bf16.msra.mxu0 0
      %1273 = vmatprep.subr.bf16.mxu0 0
      %1274 = vmatpush1.bf16.msra.mxu0 0
      %1275 = vmatprep.subr.bf16.mxu0 0
      %1276 = vmatpush1.bf16.msra.mxu0 0
      %1277 = vmatprep.subr.bf16.mxu0 0
      %1278 = vmatpush1.bf16.msra.mxu0 0
      %1279 = vmatprep.subr.bf16.mxu0 0
      %1280 = vmatpush1.bf16.msra.mxu0 0
      %1281 = vmatprep.subr.bf16.mxu0 0
      %1282 = vmatpush1.bf16.msra.mxu0 0
      %1283 = vmatprep.subr.bf16.mxu0 0
      %1284 = vmatpush1.bf16.msra.mxu0 0
      %1285 = vmatprep.subr.bf16.mxu0 0
      %1286 = vmatpush1.bf16.msra.mxu0 0
      %1287 = vmatprep.subr.bf16.mxu0 0
      %1288 = vmatpush1.bf16.msra.mxu0 0
      %1289 = vmatprep.subr.bf16.mxu0 0
      %1290 = vmatpush1.bf16.msra.mxu0 0
      %1291 = vmatprep.subr.bf16.mxu0 0
      %1292 = vmatpush1.bf16.msra.mxu0 0
      %1293 = vmatprep.subr.bf16.mxu0 0
      %1294 = vmatpush1.bf16.msra.mxu0 0
      %1295 = vmatprep.mubr.bf16.mxu0 0
      %1296 = vmatmul.mubr.bf16.gmra.mrb[0].mxu0 %v1258
      %v1297 = vpop.f32.mrb[0].mxu0
      %v1298 = vadd.f32 0.0, %v1297
      %v1299 = vpop.f32.mrb[0].mxu0
      %v1300 = vpop.f32.mrb[0].mxu0
      %v1301 = vpop.f32.mrb[0].mxu0
      %1302 = vdwg.mxu0
      %v1303 = vpack.c.bf16 %v1298, %v1298
      %s1304 = scalar_lea.vmem %s8, 8
      %v1305 = vld [vmem:[%s1304] sm:$0xf]
      %v1307 = vsel %vm470, %v1303, 0
      %v1310 = vsel %vm474, %v1305, 0
      %1312 = vmatprep.subr.bf16.mxu0 0
      %1313 = vmatpush1.bf16.msra.mxu0 %v1310
      %1314 = vmatprep.subr.bf16.mxu0 0
      %1315 = vmatpush1.bf16.msra.mxu0 0
      %1316 = vmatprep.subr.bf16.mxu0 0
      %1317 = vmatpush1.bf16.msra.mxu0 0
      %1318 = vmatprep.subr.bf16.mxu0 0
      %1319 = vmatpush1.bf16.msra.mxu0 0
      %1320 = vmatprep.subr.bf16.mxu0 0
      %1321 = vmatpush1.bf16.msra.mxu0 0
      %1322 = vmatprep.subr.bf16.mxu0 0
      %1323 = vmatpush1.bf16.msra.mxu0 0
      %1324 = vmatprep.subr.bf16.mxu0 0
      %1325 = vmatpush1.bf16.msra.mxu0 0
      %1326 = vmatprep.subr.bf16.mxu0 0
      %1327 = vmatpush1.bf16.msra.mxu0 0
      %1328 = vmatprep.subr.bf16.mxu0 0
      %1329 = vmatpush1.bf16.msra.mxu0 0
      %1330 = vmatprep.subr.bf16.mxu0 0
      %1331 = vmatpush1.bf16.msra.mxu0 0
      %1332 = vmatprep.subr.bf16.mxu0 0
      %1333 = vmatpush1.bf16.msra.mxu0 0
      %1334 = vmatprep.subr.bf16.mxu0 0
      %1335 = vmatpush1.bf16.msra.mxu0 0
      %1336 = vmatprep.subr.bf16.mxu0 0
      %1337 = vmatpush1.bf16.msra.mxu0 0
      %1338 = vmatprep.subr.bf16.mxu0 0
      %1339 = vmatpush1.bf16.msra.mxu0 0
      %1340 = vmatprep.subr.bf16.mxu0 0
      %1341 = vmatpush1.bf16.msra.mxu0 0
      %1342 = vmatprep.subr.bf16.mxu0 0
      %1343 = vmatpush1.bf16.msra.mxu0 0
      %1344 = vmatprep.mubr.bf16.mxu0 0
      %1345 = vmatmul.mubr.bf16.gmra.mrb[0].mxu0 %v1307
      %v1346 = vpop.f32.mrb[0].mxu0
      %v1347 = vadd.f32 0.0, %v1346
      %v1348 = vpop.f32.mrb[0].mxu0
      %v1349 = vpop.f32.mrb[0].mxu0
      %v1350 = vpop.f32.mrb[0].mxu0
      %1351 = vdwg.mxu0
      %v1352 = vadd.f32 %v1061, %v1347
      %1353 = vrot.lane.b32.xlu0 %v460, 104
      %v1354 = vpop.permute.xlu0 %1353
      %v1356 = vsel %vm470, %v1354, 0
      %1358 = vmatprep.subr.bf16.mxu0 0
      %1359 = vmatpush1.bf16.msra.mxu0 %v476
      %1360 = vmatprep.subr.bf16.mxu0 0
      %1361 = vmatpush1.bf16.msra.mxu0 0
      %1362 = vmatprep.subr.bf16.mxu0 0
      %1363 = vmatpush1.bf16.msra.mxu0 0
      %1364 = vmatprep.subr.bf16.mxu0 0
      %1365 = vmatpush1.bf16.msra.mxu0 0
      %1366 = vmatprep.subr.bf16.mxu0 0
      %1367 = vmatpush1.bf16.msra.mxu0 0
      %1368 = vmatprep.subr.bf16.mxu0 0
      %1369 = vmatpush1.bf16.msra.mxu0 0
      %1370 = vmatprep.subr.bf16.mxu0 0
      %1371 = vmatpush1.bf16.msra.mxu0 0
      %1372 = vmatprep.subr.bf16.mxu0 0
      %1373 = vmatpush1.bf16.msra.mxu0 0
      %1374 = vmatprep.subr.bf16.mxu0 0
      %1375 = vmatpush1.bf16.msra.mxu0 0
      %1376 = vmatprep.subr.bf16.mxu0 0
      %1377 = vmatpush1.bf16.msra.mxu0 0
      %1378 = vmatprep.subr.bf16.mxu0 0
      %1379 = vmatpush1.bf16.msra.mxu0 0
      %1380 = vmatprep.subr.bf16.mxu0 0
      %1381 = vmatpush1.bf16.msra.mxu0 0
      %1382 = vmatprep.subr.bf16.mxu0 0
      %1383 = vmatpush1.bf16.msra.mxu0 0
      %1384 = vmatprep.subr.bf16.mxu0 0
      %1385 = vmatpush1.bf16.msra.mxu0 0
      %1386 = vmatprep.subr.bf16.mxu0 0
      %1387 = vmatpush1.bf16.msra.mxu0 0
      %1388 = vmatprep.subr.bf16.mxu0 0
      %1389 = vmatpush1.bf16.msra.mxu0 0
      %1390 = vmatprep.mubr.bf16.mxu0 0
      %1391 = vmatmul.mubr.bf16.gmra.mrb[0].mxu0 %v1356
      %v1392 = vpop.f32.mrb[0].mxu0
      %v1393 = vadd.f32 %v468, %v1392
      %v1394 = vpop.f32.mrb[0].mxu0
      %v1395 = vpop.f32.mrb[0].mxu0
      %v1396 = vpop.f32.mrb[0].mxu0
      %1397 = vdwg.mxu0
      %1398 = vrot.lane.b32.xlu0 %v461, 104
      %v1399 = vpop.permute.xlu0 %1398
      %v1401 = vsel %vm470, %v1399, 0
      %1403 = vmatprep.subr.bf16.mxu0 0
      %1404 = vmatpush1.bf16.msra.mxu0 %v530
      %1405 = vmatprep.subr.bf16.mxu0 0
      %1406 = vmatpush1.bf16.msra.mxu0 0
      %1407 = vmatprep.subr.bf16.mxu0 0
      %1408 = vmatpush1.bf16.msra.mxu0 0
      %1409 = vmatprep.subr.bf16.mxu0 0
      %1410 = vmatpush1.bf16.msra.mxu0 0
      %1411 = vmatprep.subr.bf16.mxu0 0
      %1412 = vmatpush1.bf16.msra.mxu0 0
      %1413 = vmatprep.subr.bf16.mxu0 0
      %1414 = vmatpush1.bf16.msra.mxu0 0
      %1415 = vmatprep.subr.bf16.mxu0 0
      %1416 = vmatpush1.bf16.msra.mxu0 0
      %1417 = vmatprep.subr.bf16.mxu0 0
      %1418 = vmatpush1.bf16.msra.mxu0 0
      %1419 = vmatprep.subr.bf16.mxu0 0
      %1420 = vmatpush1.bf16.msra.mxu0 0
      %1421 = vmatprep.subr.bf16.mxu0 0
      %1422 = vmatpush1.bf16.msra.mxu0 0
      %1423 = vmatprep.subr.bf16.mxu0 0
      %1424 = vmatpush1.bf16.msra.mxu0 0
      %1425 = vmatprep.subr.bf16.mxu0 0
      %1426 = vmatpush1.bf16.msra.mxu0 0
      %1427 = vmatprep.subr.bf16.mxu0 0
      %1428 = vmatpush1.bf16.msra.mxu0 0
      %1429 = vmatprep.subr.bf16.mxu0 0
      %1430 = vmatpush1.bf16.msra.mxu0 0
      %1431 = vmatprep.subr.bf16.mxu0 0
      %1432 = vmatpush1.bf16.msra.mxu0 0
      %1433 = vmatprep.subr.bf16.mxu0 0
      %1434 = vmatpush1.bf16.msra.mxu0 0
      %1435 = vmatprep.mubr.bf16.mxu0 0
      %1436 = vmatmul.mubr.bf16.gmra.mrb[0].mxu0 %v1401
      %v1437 = vpop.f32.mrb[0].mxu0
      %v1438 = vadd.f32 %v524, %v1437
      %v1439 = vpop.f32.mrb[0].mxu0
      %v1440 = vpop.f32.mrb[0].mxu0
      %v1441 = vpop.f32.mrb[0].mxu0
      %1442 = vdwg.mxu0
      %1443 = vmatprep.subr.bf16.mxu0 0
      %1444 = vmatpush1.bf16.msra.mxu0 %v581
      %1445 = vmatprep.subr.bf16.mxu0 0
      %1446 = vmatpush1.bf16.msra.mxu0 0
      %1447 = vmatprep.subr.bf16.mxu0 0
      %1448 = vmatpush1.bf16.msra.mxu0 0
      %1449 = vmatprep.subr.bf16.mxu0 0
      %1450 = vmatpush1.bf16.msra.mxu0 0
      %1451 = vmatprep.subr.bf16.mxu0 0
      %1452 = vmatpush1.bf16.msra.mxu0 0
      %1453 = vmatprep.subr.bf16.mxu0 0
      %1454 = vmatpush1.bf16.msra.mxu0 0
      %1455 = vmatprep.subr.bf16.mxu0 0
      %1456 = vmatpush1.bf16.msra.mxu0 0
      %1457 = vmatprep.subr.bf16.mxu0 0
      %1458 = vmatpush1.bf16.msra.mxu0 0
      %1459 = vmatprep.subr.bf16.mxu0 0
      %1460 = vmatpush1.bf16.msra.mxu0 0
      %1461 = vmatprep.subr.bf16.mxu0 0
      %1462 = vmatpush1.bf16.msra.mxu0 0
      %1463 = vmatprep.subr.bf16.mxu0 0
      %1464 = vmatpush1.bf16.msra.mxu0 0
      %1465 = vmatprep.subr.bf16.mxu0 0
      %1466 = vmatpush1.bf16.msra.mxu0 0
      %1467 = vmatprep.subr.bf16.mxu0 0
      %1468 = vmatpush1.bf16.msra.mxu0 0
      %1469 = vmatprep.subr.bf16.mxu0 0
      %1470 = vmatpush1.bf16.msra.mxu0 0
      %1471 = vmatprep.subr.bf16.mxu0 0
      %1472 = vmatpush1.bf16.msra.mxu0 0
      %1473 = vmatprep.subr.bf16.mxu0 0
      %1474 = vmatpush1.bf16.msra.mxu0 0
      %1475 = vmatprep.mubr.bf16.mxu0 0
      %1476 = vmatmul.mubr.bf16.gmra.mrb[0].mxu0 %v1401
      %v1477 = vpop.f32.mrb[0].mxu0
      %v1478 = vadd.f32 %v578, %v1477
      %v1479 = vpop.f32.mrb[0].mxu0
      %v1480 = vpop.f32.mrb[0].mxu0
      %v1481 = vpop.f32.mrb[0].mxu0
      %1482 = vdwg.mxu0
      %v1483 = vpack.c.bf16 %v1393, %v1393
      %v1484 = vpack.c.bf16 %v1438, %v1438
      %v1486 = vsel %vm470, %v1483, 0
      %v1489 = vsel %vm470, %v1484, 0
      %1491 = vmatprep.subr.bf16.mxu0 0
      %1492 = vmatpush1.bf16.xpose.msra.mxu0 %v1489
      %1493 = vmatprep.subr.bf16.mxu0 0
      %1494 = vmatpush1.bf16.xpose.msra.mxu0 0
      %1495 = vmatprep.subr.bf16.mxu0 0
      %1496 = vmatpush1.bf16.xpose.msra.mxu0 0
      %1497 = vmatprep.subr.bf16.mxu0 0
      %1498 = vmatpush1.bf16.xpose.msra.mxu0 0
      %1499 = vmatprep.subr.bf16.mxu0 0
      %1500 = vmatpush1.bf16.xpose.msra.mxu0 0
      %1501 = vmatprep.subr.bf16.mxu0 0
      %1502 = vmatpush1.bf16.xpose.msra.mxu0 0
      %1503 = vmatprep.subr.bf16.mxu0 0
      %1504 = vmatpush1.bf16.xpose.msra.mxu0 0
      %1505 = vmatprep.subr.bf16.mxu0 0
      %1506 = vmatpush1.bf16.xpose.msra.mxu0 0
      %1507 = vmatprep.subr.bf16.mxu0 0
      %1508 = vmatpush1.bf16.xpose.msra.mxu0 0
      %1509 = vmatprep.subr.bf16.mxu0 0
      %1510 = vmatpush1.bf16.xpose.msra.mxu0 0
      %1511 = vmatprep.subr.bf16.mxu0 0
      %1512 = vmatpush1.bf16.xpose.msra.mxu0 0
      %1513 = vmatprep.subr.bf16.mxu0 0
      %1514 = vmatpush1.bf16.xpose.msra.mxu0 0
      %1515 = vmatprep.subr.bf16.mxu0 0
      %1516 = vmatpush1.bf16.xpose.msra.mxu0 0
      %1517 = vmatprep.subr.bf16.mxu0 0
      %1518 = vmatpush1.bf16.xpose.msra.mxu0 0
      %1519 = vmatprep.subr.bf16.mxu0 0
      %1520 = vmatpush1.bf16.xpose.msra.mxu0 0
      %1521 = vmatprep.subr.bf16.mxu0 0
      %1522 = vmatpush1.bf16.xpose.msra.mxu0 0
      %1523 = vmatprep.mubr.bf16.mxu0 0
      %1524 = vmatmul.mubr.bf16.gmra.mrb[0].mxu0 %v1486
      %v1525 = vpop.f32.mrb[0].mxu0
      %v1526 = vadd.f32 0.0, %v1525
      %v1527 = vpop.f32.mrb[0].mxu0
      %v1528 = vpop.f32.mrb[0].mxu0
      %v1529 = vpop.f32.mrb[0].mxu0
      %1530 = vdwg.mxu0
      %v1531 = vsel %vm470, %v1526, -inf
      %1532 = vmax.xlane.f32.xlu0 %v1531
      %v1533 = vpop.xlane.xlu0 %1532
      %v1534 = vsub.f32 %v1526, %v1533
      %v1535 = vmul.f32 %v1534, 1.442695
      %v1536 = vpow.pop %v1535
      %v1537 = vsel %vm470, %v1536, 0.0
      %1538 = vadd.xlane.f32.xlu0 %v1537
      %v1539 = vpop.xlane.xlu0 %1538
      %v1540 = vrcp.pop %v1539
      %v1541 = vmul.f32 %v1536, %v1540
      %v1542 = vpack.c.bf16 %v1541, %v1541
      %v1543 = vpack.c.bf16 %v1478, %v1478
      %v1545 = vsel %vm470, %v1542, 0
      %v1548 = vsel %vm474, %v1543, 0
      %1550 = vmatprep.subr.bf16.mxu0 0
      %1551 = vmatpush1.bf16.msra.mxu0 %v1548
      %1552 = vmatprep.subr.bf16.mxu0 0
      %1553 = vmatpush1.bf16.msra.mxu0 0
      %1554 = vmatprep.subr.bf16.mxu0 0
      %1555 = vmatpush1.bf16.msra.mxu0 0
      %1556 = vmatprep.subr.bf16.mxu0 0
      %1557 = vmatpush1.bf16.msra.mxu0 0
      %1558 = vmatprep.subr.bf16.mxu0 0
      %1559 = vmatpush1.bf16.msra.mxu0 0
      %1560 = vmatprep.subr.bf16.mxu0 0
      %1561 = vmatpush1.bf16.msra.mxu0 0
      %1562 = vmatprep.subr.bf16.mxu0 0
      %1563 = vmatpush1.bf16.msra.mxu0 0
      %1564 = vmatprep.subr.bf16.mxu0 0
      %1565 = vmatpush1.bf16.msra.mxu0 0
      %1566 = vmatprep.subr.bf16.mxu0 0
      %1567 = vmatpush1.bf16.msra.mxu0 0
      %1568 = vmatprep.subr.bf16.mxu0 0
      %1569 = vmatpush1.bf16.msra.mxu0 0
      %1570 = vmatprep.subr.bf16.mxu0 0
      %1571 = vmatpush1.bf16.msra.mxu0 0
      %1572 = vmatprep.subr.bf16.mxu0 0
      %1573 = vmatpush1.bf16.msra.mxu0 0
      %1574 = vmatprep.subr.bf16.mxu0 0
      %1575 = vmatpush1.bf16.msra.mxu0 0
      %1576 = vmatprep.subr.bf16.mxu0 0
      %1577 = vmatpush1.bf16.msra.mxu0 0
      %1578 = vmatprep.subr.bf16.mxu0 0
      %1579 = vmatpush1.bf16.msra.mxu0 0
      %1580 = vmatprep.subr.bf16.mxu0 0
      %1581 = vmatpush1.bf16.msra.mxu0 0
      %1582 = vmatprep.mubr.bf16.mxu0 0
      %1583 = vmatmul.mubr.bf16.gmra.mrb[0].mxu0 %v1545
      %v1584 = vpop.f32.mrb[0].mxu0
      %v1585 = vadd.f32 0.0, %v1584
      %v1586 = vpop.f32.mrb[0].mxu0
      %v1587 = vpop.f32.mrb[0].mxu0
      %v1588 = vpop.f32.mrb[0].mxu0
      %1589 = vdwg.mxu0
      %v1590 = vpack.c.bf16 %v1585, %v1585
      %s1591 = scalar_lea.vmem %s8, 12
      %v1592 = vld [vmem:[%s1591] sm:$0xf]
      %v1594 = vsel %vm470, %v1590, 0
      %v1597 = vsel %vm474, %v1592, 0
      %1599 = vmatprep.subr.bf16.mxu0 0
      %1600 = vmatpush1.bf16.msra.mxu0 %v1597
      %1601 = vmatprep.subr.bf16.mxu0 0
      %1602 = vmatpush1.bf16.msra.mxu0 0
      %1603 = vmatprep.subr.bf16.mxu0 0
      %1604 = vmatpush1.bf16.msra.mxu0 0
      %1605 = vmatprep.subr.bf16.mxu0 0
      %1606 = vmatpush1.bf16.msra.mxu0 0
      %1607 = vmatprep.subr.bf16.mxu0 0
      %1608 = vmatpush1.bf16.msra.mxu0 0
      %1609 = vmatprep.subr.bf16.mxu0 0
      %1610 = vmatpush1.bf16.msra.mxu0 0
      %1611 = vmatprep.subr.bf16.mxu0 0
      %1612 = vmatpush1.bf16.msra.mxu0 0
      %1613 = vmatprep.subr.bf16.mxu0 0
      %1614 = vmatpush1.bf16.msra.mxu0 0
      %1615 = vmatprep.subr.bf16.mxu0 0
      %1616 = vmatpush1.bf16.msra.mxu0 0
      %1617 = vmatprep.subr.bf16.mxu0 0
      %1618 = vmatpush1.bf16.msra.mxu0 0
      %1619 = vmatprep.subr.bf16.mxu0 0
      %1620 = vmatpush1.bf16.msra.mxu0 0
      %1621 = vmatprep.subr.bf16.mxu0 0
      %1622 = vmatpush1.bf16.msra.mxu0 0
      %1623 = vmatprep.subr.bf16.mxu0 0
      %1624 = vmatpush1.bf16.msra.mxu0 0
      %1625 = vmatprep.subr.bf16.mxu0 0
      %1626 = vmatpush1.bf16.msra.mxu0 0
      %1627 = vmatprep.subr.bf16.mxu0 0
      %1628 = vmatpush1.bf16.msra.mxu0 0
      %1629 = vmatprep.subr.bf16.mxu0 0
      %1630 = vmatpush1.bf16.msra.mxu0 0
      %1631 = vmatprep.mubr.bf16.mxu0 0
      %1632 = vmatmul.mubr.bf16.gmra.mrb[0].mxu0 %v1594
      %v1633 = vpop.f32.mrb[0].mxu0
      %v1634 = vadd.f32 0.0, %v1633
      %v1635 = vpop.f32.mrb[0].mxu0
      %v1636 = vpop.f32.mrb[0].mxu0
      %v1637 = vpop.f32.mrb[0].mxu0
      %1638 = vdwg.mxu0
      %v1639 = vadd.f32 %v1352, %v1634
      %v1640 = vld [vmem:[%s9] sm:$0x1]
      %v1642 = vlaneseq
      %v1643 = vshrl.u32 %v1642, 7
      %v1644 = vsub.s32 0, %v1643
      %v1645 = vrot.slane %v1640, %v1644
      %v1647 = vadd.f32 %v1639, %v1645
      %v1648 = vadd.f32 %v1647, %v458
      %vm1649 = vcmask 261120
      %v1650 = vsel %vm1649, %v1648, 0.0
      %1651 = vadd.xlane.f32.xlu0 %v1650
      %v1652 = vpop.xlane.xlu0 %1651
      %v1653 = vrcp.pop 32.0
      %v1654 = vmul.f32 %v1652, %v1653
      %v1655 = vsub.f32 %v1648, %v1654
      %v1656 = vmul.f32 %v1655, %v1655
      %v1657 = vsel %vm1649, %v1656, 0.0
      %1658 = vadd.xlane.f32.xlu0 %v1657
      %v1659 = vpop.xlane.xlu0 %1658
      %v1660 = vmul.f32 %v1659, %v1653
      %v1661 = vadd.f32 %v1660, 1e-06
      %v1662 = vrsqrt.pop %v1661
      %v1663 = vmul.f32 %v1655, %v1662
      %v1664 = vld [vmem:[%s10] sm:$0x1]
      %v1666 = vlaneseq
      %v1667 = vshrl.u32 %v1666, 7
      %v1668 = vsub.s32 0, %v1667
      %v1669 = vrot.slane %v1664, %v1668
      %v1671 = vmul.f32 %v1663, %v1669
      %v1672 = vld [vmem:[%s11] sm:$0x1]
      %v1674 = vlaneseq
      %v1675 = vshrl.u32 %v1674, 7
      %v1676 = vsub.s32 0, %v1675
      %v1677 = vrot.slane %v1672, %v1676
      %v1679 = vadd.f32 %v1671, %v1677
      %1680 = vst.msk [vmem:[%s456] sm:$0xff] %vm1649, %v1679
      %p1681 = scmp.lt.s32.totalorder %s27, 1
      %s1682 = scalar_select %p1681, %s27, 1
      %p1683 = scmp.lt.s32.totalorder %s28, 0
      %s1684 = scalar_select %p1683, %s28, 0
      %s1685 = sadd.s32 %s1684, %s1682
      %s1686 = smul.addr %s1685, 8
      %s1687 = scalar_lea.vmem %s12, %s1686
      // Predicated region
      $region69: #{decoder_forward.7} parent=67 // pred_check
        %p1688 = pneg %p319
      $region70: #{decoder_forward.7} parent=67 // pred_check_branch
        %1690 = sbr.rel (%p1688) target = $region72
      $region71: #{decoder_forward.7} parent=67 // pred_region
        _
      $region72: #{decoder_forward.7} parent=67 // pred_fallthru
        _
    $region68: #{decoder_forward.7} parent=5 // pred_fallthru
      _
    %p1691 = scmp.le.s32.totalorder 2, %s18
    // Predicated region
    $region73: #{decoder_forward.7} parent=5 // pred_check
      %p1692 = pneg %p1691
    $region74: #{decoder_forward.7} parent=5 // pred_check_branch
      %1694 = sbr.rel (%p1692) target = $region76
    $region75: #{decoder_forward.7} parent=5 // pred_region
      %s1695 = ssub.s32 %s18, 2
      // Predicated region
      $region77: #{decoder_forward.7} parent=75 // pred_check
        %p1696 = pneg %p325
      $region78: #{decoder_forward.7} parent=75 // pred_check_branch
        %1698 = sbr.rel (%p1696) target = $region80
      $region79: #{decoder_forward.7} parent=75 // pred_region
        %p1699 = scmp.lt.s32.totalorder %s29, 1
        %s1700 = scalar_select %p1699, %s29, 1
        %p1701 = scmp.lt.s32.totalorder %s30, 0
        %s1702 = scalar_select %p1701, %s30, 0
        %s1703 = sadd.s32 %s1702, %s1700
        %s1704 = smul.addr %s1703, 8
        %s1705 = scalar_lea.vmem %s12, %s1704
      $region80: #{decoder_forward.7} parent=75 // pred_fallthru
        _
    $region76: #{decoder_forward.7} parent=5 // pred_fallthru
      _
  $region6: #{decoder_forward.7} parent=0 // loop_footer
    %s22 = sadd.s32 1, %s18
  $region7: #{decoder_forward.7} parent=0 // loop_footer_branch
    %17 = sbr.rel target = $region3
  $region8: #{decoder_forward.7} parent=0 // loop_exit
    _

</llo_original>
